<compile_context>
chip_gen: v7x
topology: tpu7x:2x2x1
jax: 0.10.0
libtpu: 0.0.40
codegen_flags: <defaults>
</compile_context>

<pallas_src>
import functools

import numpy as np
import jax
import jax.numpy as jnp
from jax.experimental import pallas as pl
from jax.experimental.pallas import tpu as pltpu

NUM_JOINTS = 16
NUM_BONES = 15
LINEAR_SIZE = 256
NUM_STAGE = 2
NOISE_CH = 48
D_IN = NUM_JOINTS * 3 + NUM_BONES + NOISE_CH          # 48 + 15 + 48 = 111
D_IN_PAD = 128
D_OUT_PAD = 128
BLR_TANHLIMIT = 0.2

# H36M 16-joint parents: Hip RHip RKnee RFoot LHip LKnee LFoot Spine Thorax
#                        Head LShoulder LElbow LWrist RShoulder RElbow RWrist
PARENTS = np.array([-1, 0, 1, 2, 0, 4, 5, 0, 7, 8, 8, 10, 11, 8, 13, 14])


def _np_bone_matrices():
    # C: (16,15) pose -> bone vectors (bone b = joint b+1 minus its parent)
    C = np.zeros((NUM_JOINTS, NUM_BONES), np.float32)
    for b in range(NUM_BONES):
        child = b + 1
        C[child, b] = 1.0
        C[PARENTS[child], b] = -1.0
    # Cinv: (15,16) bone vectors -> pose (cumulative sum along kinematic chain)
    Cinv = np.zeros((NUM_BONES, NUM_JOINTS), np.float32)
    for j in range(1, NUM_JOINTS):
        k = j
        while k != 0:
            Cinv[k - 1, j] = 1.0
            k = PARENTS[k]
    return C, Cinv


_C_NP, _CINV_NP = _np_bone_matrices()
C_MAT = jnp.asarray(_C_NP)                                        # (16,15)
CINV_MAT = jnp.asarray(_CINV_NP)                                  # (15,16)

# Kronecker-expanded (x I3) bone matrices on the interleaved j*3+c lane layout,
# zero-padded to a uniform 48-lane width (cols/rows 45..47 are zero).
CK48 = jnp.asarray(np.pad(np.kron(_C_NP, np.eye(3, dtype=np.float32)),
                          ((0, 0), (0, 3))))                      # (48,48)
CIK48 = jnp.asarray(np.pad(np.kron(_CINV_NP, np.eye(3, dtype=np.float32)),
                           ((0, 3), (0, 0))))                     # (48,48)
_root = np.zeros((48, 48), np.float32)
_root[0:3, :] = np.tile(np.eye(3, dtype=np.float32), (1, NUM_JOINTS))
ROOT48 = jnp.asarray(_root)                                       # picks root xyz into every joint

# 9 shared bone-length ratios -> 15 bones (left/right symmetric limbs)
_BLR9TO15_NP = np.array([
    [1, 0, 0, 0, 0, 0, 0, 0, 0],
    [0, 1, 0, 0, 0, 0, 0, 0, 0],
    [0, 0, 1, 0, 0, 0, 0, 0, 0],
    [1, 0, 0, 0, 0, 0, 0, 0, 0],
    [0, 1, 0, 0, 0, 0, 0, 0, 0],
    [0, 0, 1, 0, 0, 0, 0, 0, 0],
    [0, 0, 0, 1, 0, 0, 0, 0, 0],
    [0, 0, 0, 0, 1, 0, 0, 0, 0],
    [0, 0, 0, 0, 0, 1, 0, 0, 0],
    [0, 0, 0, 0, 0, 0, 1, 0, 0],
    [0, 0, 0, 0, 0, 0, 0, 1, 0],
    [0, 0, 0, 0, 0, 0, 0, 0, 1],
    [0, 0, 0, 0, 0, 0, 1, 0, 0],
    [0, 0, 0, 0, 0, 0, 0, 1, 0],
    [0, 0, 0, 0, 0, 0, 0, 0, 1]], np.float32)                     # (15,9)

# (128,48): blr(9, lane-padded to 128)  ->  per-bone ratio repeated x3 over xyz
_b9 = np.zeros((128, 48), np.float32)
_b9[:9, :45] = np.repeat(_BLR9TO15_NP.T, 3, axis=1)
B9SCALE = jnp.asarray(_b9)

# tmp_mask [[1,1,1,1,0,1,1,1,1]] padded to the 128-lane output width
_hm = np.zeros((1, 128), np.float32)
_hm[0, :9] = np.array([1, 1, 1, 1, 0, 1, 1, 1, 1], np.float32)
HEAD_MASK = jnp.asarray(_hm)

_VMEM = pl.BlockSpec(memory_space=pltpu.MemorySpace.VMEM)


# ----------------------------------------------------------------------------
# Kernel 1: fused BL backbone MLP + tanh head + 9->15(x3) ratio expansion
# ----------------------------------------------------------------------------
def _bl_mlp_kernel(x_ref, rmask_ref, w1_ref, b1_ref, g1_ref, be1_ref,
                   ws_ref, bs_ref, gs_ref, bes_ref, w2_ref, b2_ref,
                   head_mask_ref, b9scale_ref,
                   blr_ref, scale_ref, *, n_sub, blr_tanhlimit):
    rmask = rmask_ref[...]                       # (Npad,1): 1.0 real rows, 0.0 pad rows
    denom = jnp.sum(rmask)                       # number of real batch rows

    def bn_lrelu(y, gamma, beta):
        # training-mode BatchNorm1d: masked batch stats (biased var, eps=1e-5), f32
        mean = jnp.sum(y * rmask, axis=0, keepdims=True) / denom
        diff = y - mean
        var = jnp.sum(diff * diff * rmask, axis=0, keepdims=True) / denom
        y = diff * jax.lax.rsqrt(var + 1e-5) * gamma + beta
        return jnp.where(y > 0, y, 0.01 * y)     # LeakyReLU(0.01)

    # bf16 operands on the MXU, f32 accumulation; BN path stays f32.
    y = jnp.dot(x_ref[...].astype(jnp.bfloat16), w1_ref[...],
                preferred_element_type=jnp.float32) + b1_ref[...]
    y = bn_lrelu(y, g1_ref[...], be1_ref[...])
    for i in range(n_sub):                       # static unroll: num_stage x 2 sub-layers
        y = jnp.dot(y.astype(jnp.bfloat16), ws_ref[i],
                    preferred_element_type=jnp.float32) + bs_ref[i]
        y = bn_lrelu(y, gs_ref[i], bes_ref[i])
    y = jnp.dot(y.astype(jnp.bfloat16), w2_ref[...],
                preferred_element_type=jnp.float32) + b2_ref[...]   # (Npad,128), cols>=9 are 0

    blr = jnp.tanh(y * head_mask_ref[...]) * blr_tanhlimit          # tanh(blr*mask)*limit
    blr_ref[...] = blr
    # per-sample bone-length scale 1 + blr15 (repeated x3 over xyz), lanes 45..47 stay 1.0
    scale_ref[...] = 1.0 + jnp.dot(blr, b9scale_ref[...],
                                   preferred_element_type=jnp.float32)


# ----------------------------------------------------------------------------
# Kernel 2: blaugment9to15 over all frames (row-tiled grid, auto-pipelined)
#   bv = pose @ (C x I3); modified = bv * scale; out = modified @ (Cinv x I3) + root
#   (unit * length * (1+r) == bv * (1+r), so no norm / divide is needed)
# ----------------------------------------------------------------------------
def _blaugment_kernel(pose_ref, scale_ref, ck_ref, cik_ref, root_ref, out_ref):
    pose = pose_ref[...]                                               # (tm,48) f32
    bv = jnp.dot(pose, ck_ref[...], preferred_element_type=jnp.float32)
    mod = bv * scale_ref[...]
    out_ref[...] = (jnp.dot(mod, cik_ref[...], preferred_element_type=jnp.float32)
                    + jnp.dot(pose, root_ref[...], preferred_element_type=jnp.float32))


# ----------------------------------------------------------------------------
# Wrappers
# ----------------------------------------------------------------------------
def _pad_rows(a, mult=8):
    r = a.shape[0]
    rp = -(-r // mult) * mult
    if rp == r:
        return a
    return jnp.pad(a, [(0, rp - r)] + [(0, 0)] * (a.ndim - 1))


def bl_mlp_apply(xin, params, blr_tanhlimit):
    """xin: (N, 111) f32 -> (blr9 (N,9), scale48 (N,48))."""
    n = xin.shape[0]
    x = _pad_rows(jnp.pad(xin, ((0, 0), (0, D_IN_PAD - xin.shape[1]))))  # (Npad,128)
    npad = x.shape[0]
    rmask = _pad_rows(jnp.ones((n, 1), jnp.float32))                     # (Npad,1)
    n_sub = params['ws'].shape[0]
    kernel = functools.partial(_bl_mlp_kernel, n_sub=n_sub, blr_tanhlimit=blr_tanhlimit)
    blr_pad, scale_pad = pl.pallas_call(
        kernel,
        out_shape=(jax.ShapeDtypeStruct((npad, D_OUT_PAD), jnp.float32),
                   jax.ShapeDtypeStruct((npad, 48), jnp.float32)),
        in_specs=[_VMEM] * 14,
        out_specs=(_VMEM, _VMEM),
        compiler_params=pltpu.CompilerParams(vmem_limit_bytes=48 * 1024 * 1024),
    )(x, rmask, params['w1'], params['b1'], params['g1'], params['be1'],
      params['ws'], params['bs'], params['gs'], params['bes'],
      params['w2'], params['b2'], HEAD_MASK, B9SCALE)
    return blr_pad[:n, :9], scale_pad[:n]


def blaugment_apply(augx, scale_n, tile_m=1024):
    """augx: (N,T,16,3); scale_n: (N,48) per-sample (1+blr15) repeated over xyz."""
    n, t = augx.shape[0], augx.shape[1]
    m = n * t
    pose = augx.reshape(m, NUM_JOINTS * 3)                               # (M,48)
    scale = jnp.broadcast_to(scale_n[:, None, :], (n, t, 48)).reshape(m, 48)

    m8 = -(-m // 8) * 8
    tm = m8 if m8 <= tile_m else tile_m                                  # whole problem if small
    mpad = -(-m // tm) * tm
    pose = jnp.pad(pose, ((0, mpad - m), (0, 0)))
    scale = jnp.pad(scale, ((0, mpad - m), (0, 0)))

    out = pl.pallas_call(
        _blaugment_kernel,
        out_shape=jax.ShapeDtypeStruct((mpad, NUM_JOINTS * 3), jnp.float32),
        grid_spec=pltpu.PrefetchScalarGridSpec(
            num_scalar_prefetch=0,
            grid=(mpad // tm,),
            in_specs=[pl.BlockSpec((tm, 48), lambda i: (i, 0)),
                      pl.BlockSpec((tm, 48), lambda i: (i, 0)),
                      pl.BlockSpec((48, 48), lambda i: (0, 0)),     # resident across grid
                      pl.BlockSpec((48, 48), lambda i: (0, 0)),
                      pl.BlockSpec((48, 48), lambda i: (0, 0))],
            out_specs=pl.BlockSpec((tm, 48), lambda i: (i, 0)),
        ),
        compiler_params=pltpu.CompilerParams(dimension_semantics=("parallel",)),
    )(pose, scale, CK48, CIK48, ROOT48)
    return out[:m].reshape(n, t, NUM_JOINTS, 3)


# ----------------------------------------------------------------------------
# Deterministic parameter init (PyTorch-style uniform(-1/sqrt(fan_in), ...));
# matmul weights stored bf16, biases / BN affine stay f32.
# ----------------------------------------------------------------------------
def init_bl_generator_params(key, linear_size=LINEAR_SIZE, num_stage=NUM_STAGE):
    n_sub = 2 * num_stage
    keys = iter(jax.random.split(key, 2 * (1 + n_sub + 1)))

    def lin(fi, fo):
        bound = 1.0 / np.sqrt(fi)
        w = jax.random.uniform(next(keys), (fi, fo), jnp.float32, -bound, bound)
        b = jax.random.uniform(next(keys), (1, fo), jnp.float32, -bound, bound)
        return w, b

    w1, b1 = lin(D_IN, linear_size)
    w1 = jnp.pad(w1, ((0, D_IN_PAD - D_IN), (0, 0)))        # zero rows for padded input lanes
    ws, bs = [], []
    for _ in range(n_sub):
        w, b = lin(linear_size, linear_size)
        ws.append(w)
        bs.append(b)
    w2, b2 = lin(linear_size, 9)
    w2 = jnp.pad(w2, ((0, 0), (0, D_OUT_PAD - 9)))          # lane-dense 128-wide head
    b2 = jnp.pad(b2, ((0, 0), (0, D_OUT_PAD - 9)))
    return {
        'w1': w1.astype(jnp.bfloat16), 'b1': b1,
        'g1': jnp.ones((1, linear_size), jnp.float32),
        'be1': jnp.zeros((1, linear_size), jnp.float32),
        'ws': jnp.stack(ws).astype(jnp.bfloat16), 'bs': jnp.stack(bs),
        'gs': jnp.ones((n_sub, 1, linear_size), jnp.float32),
        'bes': jnp.zeros((n_sub, 1, linear_size), jnp.float32),
        'w2': w2.astype(jnp.bfloat16), 'b2': b2,
    }


# ----------------------------------------------------------------------------
# BLGenerator.forward
# ----------------------------------------------------------------------------
def bl_generator_forward(params, inputs_3d, augx, key,
                         noise_channle=NOISE_CH, blr_tanhlimit=BLR_TANHLIMIT):
    x5 = inputs_3d[:, 0]                                    # (N,T,16,3)
    n, t = x5.shape[0], x5.shape[1]
    x = x5 - x5[:, :, :1, :]                                # root-centered
    mid = (t - 1) // 2
    x_mid = x[:, mid]                                       # (N,16,3)

    # mid-frame bone lengths (tiny one-off; deliberately left as a single XLA fusion)
    bv_mid = jnp.einsum('njc,jb->nbc', x_mid, C_MAT)        # (N,15,3)
    bl_mid = jnp.sqrt(jnp.sum(bv_mid * bv_mid, axis=-1))    # (N,15)

    noise = jax.random.normal(key, (n, noise_channle), jnp.float32)
    xin = jnp.concatenate([x_mid.reshape(n, -1), bl_mid, noise], axis=-1)   # (N,111)

    blr9, scale48 = bl_mlp_apply(xin, params, blr_tanhlimit)                # (N,9),(N,48)
    blr = jnp.broadcast_to(blr9[:, None, :], (n, t, 9))     # repeat over pad frames

    # blaugment9to15 (reconstructed from the PoseAug reference).
    # TODO(synk): blaugment9to15 source unavailable; root translation of augx is re-added here.
    augx_bl = blaugment_apply(augx, scale48)
    return augx_bl, blr


# pure-JAX reference for the blaugment kernel (same f32 math) -----------------
def _blaugment_ref(augx, scale_n):
    n, t = augx.shape[0], augx.shape[1]
    bv = jnp.einsum('ntjc,jb->ntbc', augx, C_MAT)                    # (N,T,15,3)
    scale15 = scale_n[:, :45].reshape(n, 1, NUM_BONES, 3)
    mod = bv * scale15
    rec = jnp.einsum('ntbc,bj->ntjc', mod, CINV_MAT)
    return rec + augx[:, :, :1, :]


if __name__ == "__main__":
    key = jax.random.PRNGKey(0)
    k_params, k_in, k_aug, k_noise = jax.random.split(key, 4)

    params = init_bl_generator_params(k_params)

    N, T = 4, 9                                             # small shapes; module fixes J=16
    inputs_3d = jax.random.normal(k_in, (N, 1, T, NUM_JOINTS, 3), jnp.float32)
    augx = jax.random.normal(k_aug, (N, T, NUM_JOINTS, 3), jnp.float32)

    fwd = jax.jit(bl_generator_forward)
    augx_bl, blr = fwd(params, inputs_3d, augx, k_noise)
    augx_bl, blr = jax.block_until_ready((augx_bl, blr))

    assert augx_bl.shape == (N, T, NUM_JOINTS, 3)
    assert blr.shape == (N, T, 9)
    assert bool(jnp.all(jnp.isfinite(augx_bl)))
    assert bool(jnp.all(jnp.isfinite(blr)))
    assert bool(jnp.all(jnp.abs(blr) <= BLR_TANHLIMIT + 1e-6))      # tanh * 0.2 head
    assert bool(jnp.all(jnp.abs(blr[:, :, 4]) == 0.0))              # tmp_mask zeroes bone 4
    assert bool(jnp.max(jnp.abs(blr[:, 0] - blr[:, -1])) == 0.0)    # repeated over T

    # cross-check the bone-rescale kernel against a pure-JAX f32 reference
    scale48_chk = 1.0 + blr[:, 0] @ jnp.asarray(_b9[:9])            # (N,48)
    ref = _blaugment_ref(augx, scale48_chk)
    assert bool(jnp.max(jnp.abs(augx_bl - ref)) < 1e-3)

    print("KERNEL_OK")
</pallas_src>

<mosaic_0001>
module attributes {stable_mosaic.version = 11 : i64} {
  func.func @_bl_mlp_kernel(%arg0: memref<8x128xf32, #tpu.memory_space<vmem>>, %arg1: memref<8x1xf32, #tpu.memory_space<vmem>>, %arg2: memref<128x256xbf16, #tpu.memory_space<vmem>>, %arg3: memref<1x256xf32, #tpu.memory_space<vmem>>, %arg4: memref<1x256xf32, #tpu.memory_space<vmem>>, %arg5: memref<1x256xf32, #tpu.memory_space<vmem>>, %arg6: memref<4x256x256xbf16, #tpu.memory_space<vmem>>, %arg7: memref<4x1x256xf32, #tpu.memory_space<vmem>>, %arg8: memref<4x1x256xf32, #tpu.memory_space<vmem>>, %arg9: memref<4x1x256xf32, #tpu.memory_space<vmem>>, %arg10: memref<256x128xbf16, #tpu.memory_space<vmem>>, %arg11: memref<1x128xf32, #tpu.memory_space<vmem>>, %arg12: memref<1x128xf32, #tpu.memory_space<vmem>>, %arg13: memref<128x48xf32, #tpu.memory_space<vmem>>, %arg14: memref<8x128xf32, #tpu.memory_space<vmem>>, %arg15: memref<8x48xf32, #tpu.memory_space<vmem>>) attributes {dimension_semantics = [], scalar_prefetch = 0 : i64, scratch_operands = 0 : i64, tpu.core_type = #tpu.core_type<tc>} {
    %c0 = arith.constant 0 : index
    %c0_0 = arith.constant 0 : index
    %0 = vector.load %arg1[%c0, %c0_0] : memref<8x1xf32, #tpu.memory_space<vmem>>, vector<8x1xf32>
    %1 = vector.shape_cast %0 : vector<8x1xf32> to vector<1x8x1xf32>
    %cst = arith.constant dense<0.000000e+00> : vector<1xf32>
    %2 = vector.multi_reduction <add>, %1, %cst [1, 2] : vector<1x8x1xf32> to vector<1xf32>
    %3 = vector.shape_cast %2 : vector<1xf32> to vector<1x1x1xf32>
    %4 = vector.extract %3[0, 0, 0] : f32 from vector<1x1x1xf32>
    %c0_1 = arith.constant 0 : index
    %c0_2 = arith.constant 0 : index
    %5 = vector.load %arg0[%c0_1, %c0_2] : memref<8x128xf32, #tpu.memory_space<vmem>>, vector<8x128xf32>
    %6 = arith.truncf %5 : vector<8x128xf32> to vector<8x128xbf16>
    %c0_3 = arith.constant 0 : index
    %c0_4 = arith.constant 0 : index
    %7 = vector.load %arg2[%c0_3, %c0_4] : memref<128x256xbf16, #tpu.memory_space<vmem>>, vector<128x256xbf16>
    %cst_5 = arith.constant dense<0.000000e+00> : vector<8x256xf32>
    %8 = tpu.matmul %6, %7, %cst_5 {dimension_numbers = #tpu.dot_dimension_numbers<[1], [0], [0], [1], [0, 0, 1, 1], [], []>} : vector<8x128xbf16>, vector<128x256xbf16>, vector<8x256xf32> -> vector<8x256xf32>
    %c0_6 = arith.constant 0 : index
    %c0_7 = arith.constant 0 : index
    %9 = vector.load %arg3[%c0_6, %c0_7] : memref<1x256xf32, #tpu.memory_space<vmem>>, vector<1x256xf32>
    %10 = vector.broadcast %9 : vector<1x256xf32> to vector<8x256xf32>
    %11 = arith.addf %8, %10 : vector<8x256xf32>
    %c0_8 = arith.constant 0 : index
    %c0_9 = arith.constant 0 : index
    %12 = vector.load %arg4[%c0_8, %c0_9] : memref<1x256xf32, #tpu.memory_space<vmem>>, vector<1x256xf32>
    %c0_10 = arith.constant 0 : index
    %c0_11 = arith.constant 0 : index
    %13 = vector.load %arg5[%c0_10, %c0_11] : memref<1x256xf32, #tpu.memory_space<vmem>>, vector<1x256xf32>
    %14 = vector.broadcast %0 : vector<8x1xf32> to vector<8x256xf32>
    %15 = arith.mulf %11, %14 : vector<8x256xf32>
    %cst_12 = arith.constant dense<0.000000e+00> : vector<256xf32>
    %16 = vector.multi_reduction <add>, %15, %cst_12 [0] : vector<8x256xf32> to vector<256xf32>
    %17 = vector.shape_cast %16 : vector<256xf32> to vector<1x256xf32>
    %18 = vector.broadcast %4 : f32 to vector<1x256xf32>
    %19 = arith.divf %17, %18 : vector<1x256xf32>
    %20 = vector.broadcast %19 : vector<1x256xf32> to vector<8x256xf32>
    %21 = arith.subf %11, %20 : vector<8x256xf32>
    %22 = arith.mulf %21, %21 : vector<8x256xf32>
    %23 = vector.broadcast %0 : vector<8x1xf32> to vector<8x256xf32>
    %24 = arith.mulf %22, %23 : vector<8x256xf32>
    %cst_13 = arith.constant dense<0.000000e+00> : vector<256xf32>
    %25 = vector.multi_reduction <add>, %24, %cst_13 [0] : vector<8x256xf32> to vector<256xf32>
    %26 = vector.shape_cast %25 : vector<256xf32> to vector<1x256xf32>
    %27 = vector.broadcast %4 : f32 to vector<1x256xf32>
    %28 = arith.divf %26, %27 : vector<1x256xf32>
    %cst_14 = arith.constant 9.99999974E-6 : f32
    %29 = vector.broadcast %cst_14 : f32 to vector<1x256xf32>
    %30 = arith.addf %28, %29 : vector<1x256xf32>
    %31 = math.rsqrt %30 : vector<1x256xf32>
    %32 = vector.broadcast %31 : vector<1x256xf32> to vector<8x256xf32>
    %33 = arith.mulf %21, %32 : vector<8x256xf32>
    %34 = vector.broadcast %12 : vector<1x256xf32> to vector<8x256xf32>
    %35 = arith.mulf %33, %34 : vector<8x256xf32>
    %36 = vector.broadcast %13 : vector<1x256xf32> to vector<8x256xf32>
    %37 = arith.addf %35, %36 : vector<8x256xf32>
    %cst_15 = arith.constant 0.000000e+00 : f32
    %38 = vector.broadcast %cst_15 : f32 to vector<8x256xf32>
    %39 = arith.cmpf ogt, %37, %38 : vector<8x256xf32>
    %cst_16 = arith.constant 0.00999999977 : f32
    %40 = vector.broadcast %cst_16 : f32 to vector<8x256xf32>
    %41 = arith.mulf %40, %37 : vector<8x256xf32>
    %42 = arith.select %39, %37, %41 : vector<8x256xi1>, vector<8x256xf32>
    %43 = arith.truncf %42 : vector<8x256xf32> to vector<8x256xbf16>
    %c0_17 = arith.constant 0 : index
    %c0_18 = arith.constant 0 : index
    %c0_19 = arith.constant 0 : index
    %44 = vector.load %arg6[%c0_17, %c0_18, %c0_19] : memref<4x256x256xbf16, #tpu.memory_space<vmem>>, vector<1x256x256xbf16>
    %45 = vector.shape_cast %44 : vector<1x256x256xbf16> to vector<256x256xbf16>
    %cst_20 = arith.constant dense<0.000000e+00> : vector<8x256xf32>
    %46 = tpu.matmul %43, %45, %cst_20 {dimension_numbers = #tpu.dot_dimension_numbers<[1], [0], [0], [1], [0, 0, 1, 1], [], []>} : vector<8x256xbf16>, vector<256x256xbf16>, vector<8x256xf32> -> vector<8x256xf32>
    %c0_21 = arith.constant 0 : index
    %c0_22 = arith.constant 0 : index
    %c0_23 = arith.constant 0 : index
    %47 = vector.load %arg7[%c0_21, %c0_22, %c0_23] : memref<4x1x256xf32, #tpu.memory_space<vmem>>, vector<1x1x256xf32>
    %48 = vector.shape_cast %47 : vector<1x1x256xf32> to vector<1x256xf32>
    %49 = vector.broadcast %48 : vector<1x256xf32> to vector<8x256xf32>
    %50 = arith.addf %46, %49 : vector<8x256xf32>
    %c0_24 = arith.constant 0 : index
    %c0_25 = arith.constant 0 : index
    %c0_26 = arith.constant 0 : index
    %51 = vector.load %arg8[%c0_24, %c0_25, %c0_26] : memref<4x1x256xf32, #tpu.memory_space<vmem>>, vector<1x1x256xf32>
    %52 = vector.shape_cast %51 : vector<1x1x256xf32> to vector<1x256xf32>
    %c0_27 = arith.constant 0 : index
    %c0_28 = arith.constant 0 : index
    %c0_29 = arith.constant 0 : index
    %53 = vector.load %arg9[%c0_27, %c0_28, %c0_29] : memref<4x1x256xf32, #tpu.memory_space<vmem>>, vector<1x1x256xf32>
    %54 = vector.shape_cast %53 : vector<1x1x256xf32> to vector<1x256xf32>
    %55 = vector.broadcast %0 : vector<8x1xf32> to vector<8x256xf32>
    %56 = arith.mulf %50, %55 : vector<8x256xf32>
    %cst_30 = arith.constant dense<0.000000e+00> : vector<256xf32>
    %57 = vector.multi_reduction <add>, %56, %cst_30 [0] : vector<8x256xf32> to vector<256xf32>
    %58 = vector.shape_cast %57 : vector<256xf32> to vector<1x256xf32>
    %59 = vector.broadcast %4 : f32 to vector<1x256xf32>
    %60 = arith.divf %58, %59 : vector<1x256xf32>
    %61 = vector.broadcast %60 : vector<1x256xf32> to vector<8x256xf32>
    %62 = arith.subf %50, %61 : vector<8x256xf32>
    %63 = arith.mulf %62, %62 : vector<8x256xf32>
    %64 = vector.broadcast %0 : vector<8x1xf32> to vector<8x256xf32>
    %65 = arith.mulf %63, %64 : vector<8x256xf32>
    %cst_31 = arith.constant dense<0.000000e+00> : vector<256xf32>
    %66 = vector.multi_reduction <add>, %65, %cst_31 [0] : vector<8x256xf32> to vector<256xf32>
    %67 = vector.shape_cast %66 : vector<256xf32> to vector<1x256xf32>
    %68 = vector.broadcast %4 : f32 to vector<1x256xf32>
    %69 = arith.divf %67, %68 : vector<1x256xf32>
    %cst_32 = arith.constant 9.99999974E-6 : f32
    %70 = vector.broadcast %cst_32 : f32 to vector<1x256xf32>
    %71 = arith.addf %69, %70 : vector<1x256xf32>
    %72 = math.rsqrt %71 : vector<1x256xf32>
    %73 = vector.broadcast %72 : vector<1x256xf32> to vector<8x256xf32>
    %74 = arith.mulf %62, %73 : vector<8x256xf32>
    %75 = vector.broadcast %52 : vector<1x256xf32> to vector<8x256xf32>
    %76 = arith.mulf %74, %75 : vector<8x256xf32>
    %77 = vector.broadcast %54 : vector<1x256xf32> to vector<8x256xf32>
    %78 = arith.addf %76, %77 : vector<8x256xf32>
    %cst_33 = arith.constant 0.000000e+00 : f32
    %79 = vector.broadcast %cst_33 : f32 to vector<8x256xf32>
    %80 = arith.cmpf ogt, %78, %79 : vector<8x256xf32>
    %cst_34 = arith.constant 0.00999999977 : f32
    %81 = vector.broadcast %cst_34 : f32 to vector<8x256xf32>
    %82 = arith.mulf %81, %78 : vector<8x256xf32>
    %83 = arith.select %80, %78, %82 : vector<8x256xi1>, vector<8x256xf32>
    %84 = arith.truncf %83 : vector<8x256xf32> to vector<8x256xbf16>
    %c1 = arith.constant 1 : index
    %c0_35 = arith.constant 0 : index
    %c0_36 = arith.constant 0 : index
    %85 = vector.load %arg6[%c1, %c0_35, %c0_36] : memref<4x256x256xbf16, #tpu.memory_space<vmem>>, vector<1x256x256xbf16>
    %86 = vector.shape_cast %85 : vector<1x256x256xbf16> to vector<256x256xbf16>
    %cst_37 = arith.constant dense<0.000000e+00> : vector<8x256xf32>
    %87 = tpu.matmul %84, %86, %cst_37 {dimension_numbers = #tpu.dot_dimension_numbers<[1], [0], [0], [1], [0, 0, 1, 1], [], []>} : vector<8x256xbf16>, vector<256x256xbf16>, vector<8x256xf32> -> vector<8x256xf32>
    %c1_38 = arith.constant 1 : index
    %c0_39 = arith.constant 0 : index
    %c0_40 = arith.constant 0 : index
    %88 = vector.load %arg7[%c1_38, %c0_39, %c0_40] : memref<4x1x256xf32, #tpu.memory_space<vmem>>, vector<1x1x256xf32>
    %89 = vector.shape_cast %88 : vector<1x1x256xf32> to vector<1x256xf32>
    %90 = vector.broadcast %89 : vector<1x256xf32> to vector<8x256xf32>
    %91 = arith.addf %87, %90 : vector<8x256xf32>
    %c1_41 = arith.constant 1 : index
    %c0_42 = arith.constant 0 : index
    %c0_43 = arith.constant 0 : index
    %92 = vector.load %arg8[%c1_41, %c0_42, %c0_43] : memref<4x1x256xf32, #tpu.memory_space<vmem>>, vector<1x1x256xf32>
    %93 = vector.shape_cast %92 : vector<1x1x256xf32> to vector<1x256xf32>
    %c1_44 = arith.constant 1 : index
    %c0_45 = arith.constant 0 : index
    %c0_46 = arith.constant 0 : index
    %94 = vector.load %arg9[%c1_44, %c0_45, %c0_46] : memref<4x1x256xf32, #tpu.memory_space<vmem>>, vector<1x1x256xf32>
    %95 = vector.shape_cast %94 : vector<1x1x256xf32> to vector<1x256xf32>
    %96 = vector.broadcast %0 : vector<8x1xf32> to vector<8x256xf32>
    %97 = arith.mulf %91, %96 : vector<8x256xf32>
    %cst_47 = arith.constant dense<0.000000e+00> : vector<256xf32>
    %98 = vector.multi_reduction <add>, %97, %cst_47 [0] : vector<8x256xf32> to vector<256xf32>
    %99 = vector.shape_cast %98 : vector<256xf32> to vector<1x256xf32>
    %100 = vector.broadcast %4 : f32 to vector<1x256xf32>
    %101 = arith.divf %99, %100 : vector<1x256xf32>
    %102 = vector.broadcast %101 : vector<1x256xf32> to vector<8x256xf32>
    %103 = arith.subf %91, %102 : vector<8x256xf32>
    %104 = arith.mulf %103, %103 : vector<8x256xf32>
    %105 = vector.broadcast %0 : vector<8x1xf32> to vector<8x256xf32>
    %106 = arith.mulf %104, %105 : vector<8x256xf32>
    %cst_48 = arith.constant dense<0.000000e+00> : vector<256xf32>
    %107 = vector.multi_reduction <add>, %106, %cst_48 [0] : vector<8x256xf32> to vector<256xf32>
    %108 = vector.shape_cast %107 : vector<256xf32> to vector<1x256xf32>
    %109 = vector.broadcast %4 : f32 to vector<1x256xf32>
    %110 = arith.divf %108, %109 : vector<1x256xf32>
    %cst_49 = arith.constant 9.99999974E-6 : f32
    %111 = vector.broadcast %cst_49 : f32 to vector<1x256xf32>
    %112 = arith.addf %110, %111 : vector<1x256xf32>
    %113 = math.rsqrt %112 : vector<1x256xf32>
    %114 = vector.broadcast %113 : vector<1x256xf32> to vector<8x256xf32>
    %115 = arith.mulf %103, %114 : vector<8x256xf32>
    %116 = vector.broadcast %93 : vector<1x256xf32> to vector<8x256xf32>
    %117 = arith.mulf %115, %116 : vector<8x256xf32>
    %118 = vector.broadcast %95 : vector<1x256xf32> to vector<8x256xf32>
    %119 = arith.addf %117, %118 : vector<8x256xf32>
    %cst_50 = arith.constant 0.000000e+00 : f32
    %120 = vector.broadcast %cst_50 : f32 to vector<8x256xf32>
    %121 = arith.cmpf ogt, %119, %120 : vector<8x256xf32>
    %cst_51 = arith.constant 0.00999999977 : f32
    %122 = vector.broadcast %cst_51 : f32 to vector<8x256xf32>
    %123 = arith.mulf %122, %119 : vector<8x256xf32>
    %124 = arith.select %121, %119, %123 : vector<8x256xi1>, vector<8x256xf32>
    %125 = arith.truncf %124 : vector<8x256xf32> to vector<8x256xbf16>
    %c2 = arith.constant 2 : index
    %c0_52 = arith.constant 0 : index
    %c0_53 = arith.constant 0 : index
    %126 = vector.load %arg6[%c2, %c0_52, %c0_53] : memref<4x256x256xbf16, #tpu.memory_space<vmem>>, vector<1x256x256xbf16>
    %127 = vector.shape_cast %126 : vector<1x256x256xbf16> to vector<256x256xbf16>
    %cst_54 = arith.constant dense<0.000000e+00> : vector<8x256xf32>
    %128 = tpu.matmul %125, %127, %cst_54 {dimension_numbers = #tpu.dot_dimension_numbers<[1], [0], [0], [1], [0, 0, 1, 1], [], []>} : vector<8x256xbf16>, vector<256x256xbf16>, vector<8x256xf32> -> vector<8x256xf32>
    %c2_55 = arith.constant 2 : index
    %c0_56 = arith.constant 0 : index
    %c0_57 = arith.constant 0 : index
    %129 = vector.load %arg7[%c2_55, %c0_56, %c0_57] : memref<4x1x256xf32, #tpu.memory_space<vmem>>, vector<1x1x256xf32>
    %130 = vector.shape_cast %129 : vector<1x1x256xf32> to vector<1x256xf32>
    %131 = vector.broadcast %130 : vector<1x256xf32> to vector<8x256xf32>
    %132 = arith.addf %128, %131 : vector<8x256xf32>
    %c2_58 = arith.constant 2 : index
    %c0_59 = arith.constant 0 : index
    %c0_60 = arith.constant 0 : index
    %133 = vector.load %arg8[%c2_58, %c0_59, %c0_60] : memref<4x1x256xf32, #tpu.memory_space<vmem>>, vector<1x1x256xf32>
    %134 = vector.shape_cast %133 : vector<1x1x256xf32> to vector<1x256xf32>
    %c2_61 = arith.constant 2 : index
    %c0_62 = arith.constant 0 : index
    %c0_63 = arith.constant 0 : index
    %135 = vector.load %arg9[%c2_61, %c0_62, %c0_63] : memref<4x1x256xf32, #tpu.memory_space<vmem>>, vector<1x1x256xf32>
    %136 = vector.shape_cast %135 : vector<1x1x256xf32> to vector<1x256xf32>
    %137 = vector.broadcast %0 : vector<8x1xf32> to vector<8x256xf32>
    %138 = arith.mulf %132, %137 : vector<8x256xf32>
    %cst_64 = arith.constant dense<0.000000e+00> : vector<256xf32>
    %139 = vector.multi_reduction <add>, %138, %cst_64 [0] : vector<8x256xf32> to vector<256xf32>
    %140 = vector.shape_cast %139 : vector<256xf32> to vector<1x256xf32>
    %141 = vector.broadcast %4 : f32 to vector<1x256xf32>
    %142 = arith.divf %140, %141 : vector<1x256xf32>
    %143 = vector.broadcast %142 : vector<1x256xf32> to vector<8x256xf32>
    %144 = arith.subf %132, %143 : vector<8x256xf32>
    %145 = arith.mulf %144, %144 : vector<8x256xf32>
    %146 = vector.broadcast %0 : vector<8x1xf32> to vector<8x256xf32>
    %147 = arith.mulf %145, %146 : vector<8x256xf32>
    %cst_65 = arith.constant dense<0.000000e+00> : vector<256xf32>
    %148 = vector.multi_reduction <add>, %147, %cst_65 [0] : vector<8x256xf32> to vector<256xf32>
    %149 = vector.shape_cast %148 : vector<256xf32> to vector<1x256xf32>
    %150 = vector.broadcast %4 : f32 to vector<1x256xf32>
    %151 = arith.divf %149, %150 : vector<1x256xf32>
    %cst_66 = arith.constant 9.99999974E-6 : f32
    %152 = vector.broadcast %cst_66 : f32 to vector<1x256xf32>
    %153 = arith.addf %151, %152 : vector<1x256xf32>
    %154 = math.rsqrt %153 : vector<1x256xf32>
    %155 = vector.broadcast %154 : vector<1x256xf32> to vector<8x256xf32>
    %156 = arith.mulf %144, %155 : vector<8x256xf32>
    %157 = vector.broadcast %134 : vector<1x256xf32> to vector<8x256xf32>
    %158 = arith.mulf %156, %157 : vector<8x256xf32>
    %159 = vector.broadcast %136 : vector<1x256xf32> to vector<8x256xf32>
    %160 = arith.addf %158, %159 : vector<8x256xf32>
    %cst_67 = arith.constant 0.000000e+00 : f32
    %161 = vector.broadcast %cst_67 : f32 to vector<8x256xf32>
    %162 = arith.cmpf ogt, %160, %161 : vector<8x256xf32>
    %cst_68 = arith.constant 0.00999999977 : f32
    %163 = vector.broadcast %cst_68 : f32 to vector<8x256xf32>
    %164 = arith.mulf %163, %160 : vector<8x256xf32>
    %165 = arith.select %162, %160, %164 : vector<8x256xi1>, vector<8x256xf32>
    %166 = arith.truncf %165 : vector<8x256xf32> to vector<8x256xbf16>
    %c3 = arith.constant 3 : index
    %c0_69 = arith.constant 0 : index
    %c0_70 = arith.constant 0 : index
    %167 = vector.load %arg6[%c3, %c0_69, %c0_70] : memref<4x256x256xbf16, #tpu.memory_space<vmem>>, vector<1x256x256xbf16>
    %168 = vector.shape_cast %167 : vector<1x256x256xbf16> to vector<256x256xbf16>
    %cst_71 = arith.constant dense<0.000000e+00> : vector<8x256xf32>
    %169 = tpu.matmul %166, %168, %cst_71 {dimension_numbers = #tpu.dot_dimension_numbers<[1], [0], [0], [1], [0, 0, 1, 1], [], []>} : vector<8x256xbf16>, vector<256x256xbf16>, vector<8x256xf32> -> vector<8x256xf32>
    %c3_72 = arith.constant 3 : index
    %c0_73 = arith.constant 0 : index
    %c0_74 = arith.constant 0 : index
    %170 = vector.load %arg7[%c3_72, %c0_73, %c0_74] : memref<4x1x256xf32, #tpu.memory_space<vmem>>, vector<1x1x256xf32>
    %171 = vector.shape_cast %170 : vector<1x1x256xf32> to vector<1x256xf32>
    %172 = vector.broadcast %171 : vector<1x256xf32> to vector<8x256xf32>
    %173 = arith.addf %169, %172 : vector<8x256xf32>
    %c3_75 = arith.constant 3 : index
    %c0_76 = arith.constant 0 : index
    %c0_77 = arith.constant 0 : index
    %174 = vector.load %arg8[%c3_75, %c0_76, %c0_77] : memref<4x1x256xf32, #tpu.memory_space<vmem>>, vector<1x1x256xf32>
    %175 = vector.shape_cast %174 : vector<1x1x256xf32> to vector<1x256xf32>
    %c3_78 = arith.constant 3 : index
    %c0_79 = arith.constant 0 : index
    %c0_80 = arith.constant 0 : index
    %176 = vector.load %arg9[%c3_78, %c0_79, %c0_80] : memref<4x1x256xf32, #tpu.memory_space<vmem>>, vector<1x1x256xf32>
    %177 = vector.shape_cast %176 : vector<1x1x256xf32> to vector<1x256xf32>
    %178 = vector.broadcast %0 : vector<8x1xf32> to vector<8x256xf32>
    %179 = arith.mulf %173, %178 : vector<8x256xf32>
    %cst_81 = arith.constant dense<0.000000e+00> : vector<256xf32>
    %180 = vector.multi_reduction <add>, %179, %cst_81 [0] : vector<8x256xf32> to vector<256xf32>
    %181 = vector.shape_cast %180 : vector<256xf32> to vector<1x256xf32>
    %182 = vector.broadcast %4 : f32 to vector<1x256xf32>
    %183 = arith.divf %181, %182 : vector<1x256xf32>
    %184 = vector.broadcast %183 : vector<1x256xf32> to vector<8x256xf32>
    %185 = arith.subf %173, %184 : vector<8x256xf32>
    %186 = arith.mulf %185, %185 : vector<8x256xf32>
    %187 = vector.broadcast %0 : vector<8x1xf32> to vector<8x256xf32>
    %188 = arith.mulf %186, %187 : vector<8x256xf32>
    %cst_82 = arith.constant dense<0.000000e+00> : vector<256xf32>
    %189 = vector.multi_reduction <add>, %188, %cst_82 [0] : vector<8x256xf32> to vector<256xf32>
    %190 = vector.shape_cast %189 : vector<256xf32> to vector<1x256xf32>
    %191 = vector.broadcast %4 : f32 to vector<1x256xf32>
    %192 = arith.divf %190, %191 : vector<1x256xf32>
    %cst_83 = arith.constant 9.99999974E-6 : f32
    %193 = vector.broadcast %cst_83 : f32 to vector<1x256xf32>
    %194 = arith.addf %192, %193 : vector<1x256xf32>
    %195 = math.rsqrt %194 : vector<1x256xf32>
    %196 = vector.broadcast %195 : vector<1x256xf32> to vector<8x256xf32>
    %197 = arith.mulf %185, %196 : vector<8x256xf32>
    %198 = vector.broadcast %175 : vector<1x256xf32> to vector<8x256xf32>
    %199 = arith.mulf %197, %198 : vector<8x256xf32>
    %200 = vector.broadcast %177 : vector<1x256xf32> to vector<8x256xf32>
    %201 = arith.addf %199, %200 : vector<8x256xf32>
    %cst_84 = arith.constant 0.000000e+00 : f32
    %202 = vector.broadcast %cst_84 : f32 to vector<8x256xf32>
    %203 = arith.cmpf ogt, %201, %202 : vector<8x256xf32>
    %cst_85 = arith.constant 0.00999999977 : f32
    %204 = vector.broadcast %cst_85 : f32 to vector<8x256xf32>
    %205 = arith.mulf %204, %201 : vector<8x256xf32>
    %206 = arith.select %203, %201, %205 : vector<8x256xi1>, vector<8x256xf32>
    %207 = arith.truncf %206 : vector<8x256xf32> to vector<8x256xbf16>
    %c0_86 = arith.constant 0 : index
    %c0_87 = arith.constant 0 : index
    %208 = vector.load %arg10[%c0_86, %c0_87] : memref<256x128xbf16, #tpu.memory_space<vmem>>, vector<256x128xbf16>
    %cst_88 = arith.constant dense<0.000000e+00> : vector<8x128xf32>
    %209 = tpu.matmul %207, %208, %cst_88 {dimension_numbers = #tpu.dot_dimension_numbers<[1], [0], [0], [1], [0, 0, 1, 1], [], []>} : vector<8x256xbf16>, vector<256x128xbf16>, vector<8x128xf32> -> vector<8x128xf32>
    %c0_89 = arith.constant 0 : index
    %c0_90 = arith.constant 0 : index
    %210 = vector.load %arg11[%c0_89, %c0_90] : memref<1x128xf32, #tpu.memory_space<vmem>>, vector<1x128xf32>
    %211 = vector.broadcast %210 : vector<1x128xf32> to vector<8x128xf32>
    %212 = arith.addf %209, %211 : vector<8x128xf32>
    %c0_91 = arith.constant 0 : index
    %c0_92 = arith.constant 0 : index
    %213 = vector.load %arg12[%c0_91, %c0_92] : memref<1x128xf32, #tpu.memory_space<vmem>>, vector<1x128xf32>
    %214 = vector.broadcast %213 : vector<1x128xf32> to vector<8x128xf32>
    %215 = arith.mulf %212, %214 : vector<8x128xf32>
    %216 = math.tanh %215 : vector<8x128xf32>
    %cst_93 = arith.constant 2.000000e-01 : f32
    %217 = vector.broadcast %cst_93 : f32 to vector<8x128xf32>
    %218 = arith.mulf %216, %217 : vector<8x128xf32>
    %c0_94 = arith.constant 0 : index
    %c0_95 = arith.constant 0 : index
    %219 = vector.load %arg14[%c0_94, %c0_95] : memref<8x128xf32, #tpu.memory_space<vmem>>, vector<8x128xf32>
    tpu.vector_store %arg14[%c0_94, %c0_95], %218 {strides = array<i32>} : memref<8x128xf32, #tpu.memory_space<vmem>>, vector<8x128xf32>,
    %c0_96 = arith.constant 0 : index
    %c0_97 = arith.constant 0 : index
    %220 = vector.load %arg13[%c0_96, %c0_97] : memref<128x48xf32, #tpu.memory_space<vmem>>, vector<128x48xf32>
    %cst_98 = arith.constant dense<0.000000e+00> : vector<8x48xf32>
    %221 = tpu.matmul %218, %220, %cst_98 {dimension_numbers = #tpu.dot_dimension_numbers<[1], [0], [0], [1], [0, 0, 1, 1], [], []>} : vector<8x128xf32>, vector<128x48xf32>, vector<8x48xf32> -> vector<8x48xf32>
    %cst_99 = arith.constant 1.000000e+00 : f32
    %222 = vector.broadcast %cst_99 : f32 to vector<8x48xf32>
    %223 = arith.addf %222, %221 : vector<8x48xf32>
    %c0_100 = arith.constant 0 : index
    %c0_101 = arith.constant 0 : index
    %224 = vector.load %arg15[%c0_100, %c0_101] : memref<8x48xf32, #tpu.memory_space<vmem>>, vector<8x48xf32>
    tpu.vector_store %arg15[%c0_100, %c0_101], %223 {strides = array<i32>} : memref<8x48xf32, #tpu.memory_space<vmem>>, vector<8x48xf32>,
    return
  }
}

module attributes {stable_mosaic.version = 11 : i64} {
  func.func @_blaugment_kernel(%arg0: i32, %arg1: memref<40x48xf32, #tpu.memory_space<vmem>>, %arg2: memref<40x48xf32, #tpu.memory_space<vmem>>, %arg3: memref<48x48xf32, #tpu.memory_space<vmem>>, %arg4: memref<48x48xf32, #tpu.memory_space<vmem>>, %arg5: memref<48x48xf32, #tpu.memory_space<vmem>>, %arg6: memref<40x48xf32, #tpu.memory_space<vmem>>) attributes {dimension_semantics = [#tpu.dimension_semantics<parallel>], iteration_bounds = array<i64: 1>, scalar_prefetch = 0 : i64, scratch_operands = 0 : i64, tpu.core_type = #tpu.core_type<tc>, window_params = [{transform_indices = @transform_0, window_bounds = array<i64: 40, 48>}, {transform_indices = @transform_1, window_bounds = array<i64: 40, 48>}, {pipeline_mode = #tpu.pipeline_mode<synchronous>, transform_indices = @transform_2, window_bounds = array<i64: 48, 48>}, {pipeline_mode = #tpu.pipeline_mode<synchronous>, transform_indices = @transform_3, window_bounds = array<i64: 48, 48>}, {pipeline_mode = #tpu.pipeline_mode<synchronous>, transform_indices = @transform_4, window_bounds = array<i64: 48, 48>}, {transform_indices = @transform_5, window_bounds = array<i64: 40, 48>}]} {
    %c0 = arith.constant 0 : index
    %c0_0 = arith.constant 0 : index
    %0 = vector.load %arg1[%c0, %c0_0] : memref<40x48xf32, #tpu.memory_space<vmem>>, vector<40x48xf32>
    %c0_1 = arith.constant 0 : index
    %c0_2 = arith.constant 0 : index
    %1 = vector.load %arg3[%c0_1, %c0_2] : memref<48x48xf32, #tpu.memory_space<vmem>>, vector<48x48xf32>
    %cst = arith.constant dense<0.000000e+00> : vector<40x48xf32>
    %2 = tpu.matmul %0, %1, %cst {dimension_numbers = #tpu.dot_dimension_numbers<[1], [0], [0], [1], [0, 0, 1, 1], [], []>} : vector<40x48xf32>, vector<48x48xf32>, vector<40x48xf32> -> vector<40x48xf32>
    %c0_3 = arith.constant 0 : index
    %c0_4 = arith.constant 0 : index
    %3 = vector.load %arg2[%c0_3, %c0_4] : memref<40x48xf32, #tpu.memory_space<vmem>>, vector<40x48xf32>
    %4 = arith.mulf %2, %3 : vector<40x48xf32>
    %c0_5 = arith.constant 0 : index
    %c0_6 = arith.constant 0 : index
    %5 = vector.load %arg4[%c0_5, %c0_6] : memref<48x48xf32, #tpu.memory_space<vmem>>, vector<48x48xf32>
    %cst_7 = arith.constant dense<0.000000e+00> : vector<40x48xf32>
    %6 = tpu.matmul %4, %5, %cst_7 {dimension_numbers = #tpu.dot_dimension_numbers<[1], [0], [0], [1], [0, 0, 1, 1], [], []>} : vector<40x48xf32>, vector<48x48xf32>, vector<40x48xf32> -> vector<40x48xf32>
    %c0_8 = arith.constant 0 : index
    %c0_9 = arith.constant 0 : index
    %7 = vector.load %arg5[%c0_8, %c0_9] : memref<48x48xf32, #tpu.memory_space<vmem>>, vector<48x48xf32>
    %cst_10 = arith.constant dense<0.000000e+00> : vector<40x48xf32>
    %8 = tpu.matmul %0, %7, %cst_10 {dimension_numbers = #tpu.dot_dimension_numbers<[1], [0], [0], [1], [0, 0, 1, 1], [], []>} : vector<40x48xf32>, vector<48x48xf32>, vector<40x48xf32> -> vector<40x48xf32>
    %9 = arith.addf %6, %8 : vector<40x48xf32>
    %c0_11 = arith.constant 0 : index
    %c0_12 = arith.constant 0 : index
    %10 = vector.load %arg6[%c0_11, %c0_12] : memref<40x48xf32, #tpu.memory_space<vmem>>, vector<40x48xf32>
    tpu.vector_store %arg6[%c0_11, %c0_12], %9 {strides = array<i32>} : memref<40x48xf32, #tpu.memory_space<vmem>>, vector<40x48xf32>,
    return
  }
  func.func @transform_0(%arg0: i32) -> (i32, i32) {
    %c0_i32 = arith.constant 0 : i32
    %c0_i32_0 = arith.constant 0 : i32
    return %arg0, %c0_i32 : i32, i32
  }
  func.func @transform_1(%arg0: i32) -> (i32, i32) {
    %c0_i32 = arith.constant 0 : i32
    %c0_i32_0 = arith.constant 0 : i32
    return %arg0, %c0_i32 : i32, i32
  }
  func.func @transform_2(%arg0: i32) -> (i32, i32) {
    %c0_i32 = arith.constant 0 : i32
    %c0_i32_0 = arith.constant 0 : i32
    %c0_i32_1 = arith.constant 0 : i32
    return %c0_i32, %c0_i32_0 : i32, i32
  }
  func.func @transform_3(%arg0: i32) -> (i32, i32) {
    %c0_i32 = arith.constant 0 : i32
    %c0_i32_0 = arith.constant 0 : i32
    %c0_i32_1 = arith.constant 0 : i32
    return %c0_i32, %c0_i32_0 : i32, i32
  }
  func.func @transform_4(%arg0: i32) -> (i32, i32) {
    %c0_i32 = arith.constant 0 : i32
    %c0_i32_0 = arith.constant 0 : i32
    %c0_i32_1 = arith.constant 0 : i32
    return %c0_i32, %c0_i32_0 : i32, i32
  }
  func.func @transform_5(%arg0: i32) -> (i32, i32) {
    %c0_i32 = arith.constant 0 : i32
    %c0_i32_0 = arith.constant 0 : i32
    return %arg0, %c0_i32 : i32, i32
  }
}

</mosaic_0001>

<llo_original>
// kernel: squeeze.9
$region0: #{squeeze.9}
  %s0 = inlined_call_operand.vmem [shape: f32[4,1,16,3], index: 0, kind: input, shape index: {}]
  %s1 = inlined_call_operand.vmem [shape: f32[4,48], index: 1, kind: output, shape index: {}]
  $region1: #{squeeze.9} parent=0
    #allocation0 [shape = 'u8[4096]{0}', space=vmem, size = 0x1000, scoped, tag = 'scoped mem for output reshape']
    %s2 = smov 3
    %v3 = vld [vmem:[%s0] ss:$16 sm:%s2]
    %s4 = smov 12
    %v5 = vld [vmem:[%s0] ss:$16 sm:%s4]
    %vm6 = vcmask 1043458
    %v7 = vsel %vm6, %v5, %v3
    %vm8 = vcmask 23552
    %9 = vst.msk [vmem:[#allocation0] sm:$0xf] %vm8, %v7
    %s10 = scalar_lea.vmem %s0, 15
    %s11 = smov 3
    %v12 = vld [vmem:[%s10] ss:$16 sm:%s11]
    %s13 = scalar_lea.vmem %s0, 15
    %s14 = smov 12
    %v15 = vld [vmem:[%s13] ss:$16 sm:%s14]
    %vm16 = vcmask 1043458
    %v17 = vsel %vm16, %v15, %v12
    %18 = vrot.lane.b32.xlu0 %v17, 45
    %v19 = vpop.permute.xlu0 %18
    %vm20 = vcmask 392552
    %21 = vst.msk [vmem:[#allocation0] sm:$0xf] %vm20, %v19
    %s22 = scalar_lea.vmem %s0, 14
    %s23 = smov 3
    %v24 = vld [vmem:[%s22] ss:$16 sm:%s23]
    %s25 = scalar_lea.vmem %s0, 14
    %s26 = smov 12
    %v27 = vld [vmem:[%s25] ss:$16 sm:%s26]
    %vm28 = vcmask 1043458
    %v29 = vsel %vm28, %v27, %v24
    %30 = vrot.lane.b32.xlu0 %v29, 42
    %v31 = vpop.permute.xlu0 %30
    %vm32 = vcmask 367952
    %33 = vst.msk [vmem:[#allocation0] sm:$0xf] %vm32, %v31
    %s34 = scalar_lea.vmem %s0, 13
    %s35 = smov 3
    %v36 = vld [vmem:[%s34] ss:$16 sm:%s35]
    %s37 = scalar_lea.vmem %s0, 13
    %s38 = smov 12
    %v39 = vld [vmem:[%s37] ss:$16 sm:%s38]
    %vm40 = vcmask 1043458
    %v41 = vsel %vm40, %v39, %v36
    %42 = vrot.lane.b32.xlu0 %v41, 39
    %v43 = vpop.permute.xlu0 %42
    %vm44 = vcmask 343352
    %45 = vst.msk [vmem:[#allocation0] sm:$0xf] %vm44, %v43
    %s46 = scalar_lea.vmem %s0, 12
    %s47 = smov 3
    %v48 = vld [vmem:[%s46] ss:$16 sm:%s47]
    %s49 = scalar_lea.vmem %s0, 12
    %s50 = smov 12
    %v51 = vld [vmem:[%s49] ss:$16 sm:%s50]
    %vm52 = vcmask 1043458
    %v53 = vsel %vm52, %v51, %v48
    %54 = vrot.lane.b32.xlu0 %v53, 36
    %v55 = vpop.permute.xlu0 %54
    %vm56 = vcmask 318752
    %57 = vst.msk [vmem:[#allocation0] sm:$0xf] %vm56, %v55
    %s58 = scalar_lea.vmem %s0, 11
    %s59 = smov 3
    %v60 = vld [vmem:[%s58] ss:$16 sm:%s59]
    %s61 = scalar_lea.vmem %s0, 11
    %s62 = smov 12
    %v63 = vld [vmem:[%s61] ss:$16 sm:%s62]
    %vm64 = vcmask 1043458
    %v65 = vsel %vm64, %v63, %v60
    %66 = vrot.lane.b32.xlu0 %v65, 33
    %v67 = vpop.permute.xlu0 %66
    %vm68 = vcmask 294152
    %69 = vst.msk [vmem:[#allocation0] sm:$0xf] %vm68, %v67
    %s70 = scalar_lea.vmem %s0, 10
    %s71 = smov 3
    %v72 = vld [vmem:[%s70] ss:$16 sm:%s71]
    %s73 = scalar_lea.vmem %s0, 10
    %s74 = smov 12
    %v75 = vld [vmem:[%s73] ss:$16 sm:%s74]
    %vm76 = vcmask 1043458
    %v77 = vsel %vm76, %v75, %v72
    %78 = vrot.lane.b32.xlu0 %v77, 30
    %v79 = vpop.permute.xlu0 %78
    %vm80 = vcmask 269552
    %81 = vst.msk [vmem:[#allocation0] sm:$0xf] %vm80, %v79
    %s82 = scalar_lea.vmem %s0, 9
    %s83 = smov 3
    %v84 = vld [vmem:[%s82] ss:$16 sm:%s83]
    %s85 = scalar_lea.vmem %s0, 9
    %s86 = smov 12
    %v87 = vld [vmem:[%s85] ss:$16 sm:%s86]
    %vm88 = vcmask 1043458
    %v89 = vsel %vm88, %v87, %v84
    %90 = vrot.lane.b32.xlu0 %v89, 27
    %v91 = vpop.permute.xlu0 %90
    %vm92 = vcmask 244952
    %93 = vst.msk [vmem:[#allocation0] sm:$0xf] %vm92, %v91
    %s94 = scalar_lea.vmem %s0, 8
    %s95 = smov 3
    %v96 = vld [vmem:[%s94] ss:$16 sm:%s95]
    %s97 = scalar_lea.vmem %s0, 8
    %s98 = smov 12
    %v99 = vld [vmem:[%s97] ss:$16 sm:%s98]
    %vm100 = vcmask 1043458
    %v101 = vsel %vm100, %v99, %v96
    %102 = vrot.lane.b32.xlu0 %v101, 24
    %v103 = vpop.permute.xlu0 %102
    %vm104 = vcmask 220352
    %105 = vst.msk [vmem:[#allocation0] sm:$0xf] %vm104, %v103
    %s106 = scalar_lea.vmem %s0, 7
    %s107 = smov 3
    %v108 = vld [vmem:[%s106] ss:$16 sm:%s107]
    %s109 = scalar_lea.vmem %s0, 7
    %s110 = smov 12
    %v111 = vld [vmem:[%s109] ss:$16 sm:%s110]
    %vm112 = vcmask 1043458
    %v113 = vsel %vm112, %v111, %v108
    %114 = vrot.lane.b32.xlu0 %v113, 21
    %v115 = vpop.permute.xlu0 %114
    %vm116 = vcmask 195752
    %117 = vst.msk [vmem:[#allocation0] sm:$0xf] %vm116, %v115
    %s118 = scalar_lea.vmem %s0, 6
    %s119 = smov 3
    %v120 = vld [vmem:[%s118] ss:$16 sm:%s119]
    %s121 = scalar_lea.vmem %s0, 6
    %s122 = smov 12
    %v123 = vld [vmem:[%s121] ss:$16 sm:%s122]
    %vm124 = vcmask 1043458
    %v125 = vsel %vm124, %v123, %v120
    %126 = vrot.lane.b32.xlu0 %v125, 18
    %v127 = vpop.permute.xlu0 %126
    %vm128 = vcmask 171152
    %129 = vst.msk [vmem:[#allocation0] sm:$0xf] %vm128, %v127
    %s130 = scalar_lea.vmem %s0, 5
    %s131 = smov 3
    %v132 = vld [vmem:[%s130] ss:$16 sm:%s131]
    %s133 = scalar_lea.vmem %s0, 5
    %s134 = smov 12
    %v135 = vld [vmem:[%s133] ss:$16 sm:%s134]
    %vm136 = vcmask 1043458
    %v137 = vsel %vm136, %v135, %v132
    %138 = vrot.lane.b32.xlu0 %v137, 15
    %v139 = vpop.permute.xlu0 %138
    %vm140 = vcmask 146552
    %141 = vst.msk [vmem:[#allocation0] sm:$0xf] %vm140, %v139
    %s142 = scalar_lea.vmem %s0, 4
    %s143 = smov 3
    %v144 = vld [vmem:[%s142] ss:$16 sm:%s143]
    %s145 = scalar_lea.vmem %s0, 4
    %s146 = smov 12
    %v147 = vld [vmem:[%s145] ss:$16 sm:%s146]
    %vm148 = vcmask 1043458
    %v149 = vsel %vm148, %v147, %v144
    %150 = vrot.lane.b32.xlu0 %v149, 12
    %v151 = vpop.permute.xlu0 %150
    %vm152 = vcmask 121952
    %153 = vst.msk [vmem:[#allocation0] sm:$0xf] %vm152, %v151
    %s154 = scalar_lea.vmem %s0, 3
    %s155 = smov 3
    %v156 = vld [vmem:[%s154] ss:$16 sm:%s155]
    %s157 = scalar_lea.vmem %s0, 3
    %s158 = smov 12
    %v159 = vld [vmem:[%s157] ss:$16 sm:%s158]
    %vm160 = vcmask 1043458
    %v161 = vsel %vm160, %v159, %v156
    %162 = vrot.lane.b32.xlu0 %v161, 9
    %v163 = vpop.permute.xlu0 %162
    %vm164 = vcmask 97352
    %165 = vst.msk [vmem:[#allocation0] sm:$0xf] %vm164, %v163
    %s166 = scalar_lea.vmem %s0, 2
    %s167 = smov 3
    %v168 = vld [vmem:[%s166] ss:$16 sm:%s167]
    %s169 = scalar_lea.vmem %s0, 2
    %s170 = smov 12
    %v171 = vld [vmem:[%s169] ss:$16 sm:%s170]
    %vm172 = vcmask 1043458
    %v173 = vsel %vm172, %v171, %v168
    %174 = vrot.lane.b32.xlu0 %v173, 6
    %v175 = vpop.permute.xlu0 %174
    %vm176 = vcmask 72752
    %177 = vst.msk [vmem:[#allocation0] sm:$0xf] %vm176, %v175
    %s178 = scalar_lea.vmem %s0, 1
    %s179 = smov 3
    %v180 = vld [vmem:[%s178] ss:$16 sm:%s179]
    %s181 = scalar_lea.vmem %s0, 1
    %s182 = smov 12
    %v183 = vld [vmem:[%s181] ss:$16 sm:%s182]
    %vm184 = vcmask 1043458
    %v185 = vsel %vm184, %v183, %v180
    %186 = vrot.lane.b32.xlu0 %v185, 3
    %v187 = vpop.permute.xlu0 %186
    %vm188 = vcmask 48152
    %189 = vst.msk [vmem:[#allocation0] sm:$0xf] %vm188, %v187
    %s191 = sshllo.u32 0, 4
    %v193 = vld [vmem:[#allocation0] sm:%s191]
    %s194 = sshllo.u32 0, 4
    %195 = vst [vmem:[%s1] sm:%s194] %v193

// kernel: bl_generator_forward.3
$region0: #{bl_generator_forward.3}
  #allocation0 [shape = 'u32[]', space=smem, size = 0x4, offset = 0x4, fixed_abs, tag = 'smem constant byte address 0x4 - core index']
  #allocation1 [shape = 'u32[144,128]{1,0:T(1,128)}', space=vmem, size = 0x12000, scoped, tag = 'internal scratch']
  %s0 = inlined_call_operand.vmem [shape: f32[40,48], index: 0, kind: input, shape index: {}]
  %s1 = inlined_call_operand.vmem [shape: f32[40,48], index: 1, kind: input, shape index: {}]
  %s2 = inlined_call_operand.vmem [shape: f32[48,48], index: 2, kind: input, shape index: {}]
  %s3 = inlined_call_operand.vmem [shape: f32[48,48], index: 3, kind: input, shape index: {}]
  %s4 = inlined_call_operand.vmem [shape: f32[48,48], index: 4, kind: input, shape index: {}]
  %s5 = inlined_call_operand.vmem [shape: f32[40,48], index: 5, kind: output, shape index: {}]
  %s6 = sld [smem:[#allocation0]]
  $region30: #{bl_generator_forward.3} parent=0
    _
  %s8 = ssub.s32 1, %s6
  %s9 = scalar_select 0, %s8, %s6
  // Predicated region
  $region2: #{bl_generator_forward.3} parent=0 // pred_check
    _
  $region3: #{bl_generator_forward.3} parent=0 // pred_check_branch
    %11 = sbr.rel (0) target = $region5
  $region4: #{bl_generator_forward.3} parent=0 // pred_region
    _
  $region5: #{bl_generator_forward.3} parent=0 // pred_fallthru
    _
  // Predicated region
  $region6: #{bl_generator_forward.3} parent=0 // pred_check
    _
  $region7: #{bl_generator_forward.3} parent=0 // pred_check_branch
    %13 = sbr.rel (0) target = $region9
  $region8: #{bl_generator_forward.3} parent=0 // pred_region
    _
  $region9: #{bl_generator_forward.3} parent=0 // pred_fallthru
    _
  // Predicated region
  $region10: #{bl_generator_forward.3} parent=0 // pred_check
    _
  $region11: #{bl_generator_forward.3} parent=0 // pred_check_branch
    %15 = sbr.rel (0) target = $region13
  $region12: #{bl_generator_forward.3} parent=0 // pred_region
    _
  $region13: #{bl_generator_forward.3} parent=0 // pred_fallthru
    _
  // Predicated region
  $region14: #{bl_generator_forward.3} parent=0 // pred_check
    _
  $region15: #{bl_generator_forward.3} parent=0 // pred_check_branch
    %17 = sbr.rel (0) target = $region17
  $region16: #{bl_generator_forward.3} parent=0 // pred_region
    _
  $region17: #{bl_generator_forward.3} parent=0 // pred_fallthru
    _
  // Predicated region
  $region18: #{bl_generator_forward.3} parent=0 // pred_check
    _
  $region19: #{bl_generator_forward.3} parent=0 // pred_check_branch
    %19 = sbr.rel (0) target = $region21
  $region20: #{bl_generator_forward.3} parent=0 // pred_region
    _
  $region21: #{bl_generator_forward.3} parent=0 // pred_fallthru
    _
  %v20 = vld [vmem:[%s0] sm:$0xff]
  %v21 = vld [vmem:[%s0 + $0x8] sm:$0xff]
  %v22 = vld [vmem:[%s0 + $0x10] sm:$0xff]
  %v23 = vld [vmem:[%s0 + $0x18] sm:$0xff]
  %v24 = vld [vmem:[%s0 + $0x20] sm:$0xff]
  %v25 = vld [vmem:[%s2] sm:$0xff]
  %v26 = vld [vmem:[%s2 + $0x8] sm:$0xff]
  %v27 = vld [vmem:[%s2 + $0x10] sm:$0xff]
  %v28 = vld [vmem:[%s2 + $0x18] sm:$0xff]
  %v29 = vld [vmem:[%s2 + $0x20] sm:$0xff]
  %v30 = vld [vmem:[%s2 + $0x28] sm:$0xff]
  %vm31 = vcmask 392192
  %v33 = vsel %vm31, %v20, 0
  %v36 = vsel %vm31, %v21, 0
  %v39 = vsel %vm31, %v22, 0
  %v42 = vsel %vm31, %v23, 0
  %v45 = vsel %vm31, %v24, 0
  %47 = vmatprep.subr.mxu0 0.0
  %48 = vmatpush1.msra.mxu0 %v25
  %49 = vmatprep.subr.mxu0 0.0
  %50 = vmatpush1.msra.mxu0 %v26
  %51 = vmatprep.subr.mxu0 0.0
  %52 = vmatpush1.msra.mxu0 %v27
  %53 = vmatprep.subr.mxu0 0.0
  %54 = vmatpush1.msra.mxu0 %v28
  %55 = vmatprep.subr.mxu0 0.0
  %56 = vmatpush1.msra.mxu0 %v29
  %57 = vmatprep.subr.mxu0 0.0
  %58 = vmatpush1.msra.mxu0 %v30
  %59 = vmatprep.subr.mxu0 0.0
  %60 = vmatpush1.msra.mxu0 0.0
  %61 = vmatprep.subr.mxu0 0.0
  %62 = vmatpush1.msra.mxu0 0.0
  %63 = vmatprep.subr.mxu0 0.0
  %64 = vmatpush1.msra.mxu0 0.0
  %65 = vmatprep.subr.mxu0 0.0
  %66 = vmatpush1.msra.mxu0 0.0
  %67 = vmatprep.subr.mxu0 0.0
  %68 = vmatpush1.msra.mxu0 0.0
  %69 = vmatprep.subr.mxu0 0.0
  %70 = vmatpush1.msra.mxu0 0.0
  %71 = vmatprep.subr.mxu0 0.0
  %72 = vmatpush1.msra.mxu0 0.0
  %73 = vmatprep.subr.mxu0 0.0
  %74 = vmatpush1.msra.mxu0 0.0
  %75 = vmatprep.subr.mxu0 0.0
  %76 = vmatpush1.msra.mxu0 0.0
  %77 = vmatprep.subr.mxu0 0.0
  %78 = vmatpush1.msra.mxu0 0.0
  %79 = vmatprep.subr.mxu0 0.0
  %80 = vmatpush1.msra.mxu0 0.0
  %81 = vmatprep.subr.mxu0 0.0
  %82 = vmatpush1.msra.mxu0 0.0
  %83 = vmatprep.subr.mxu0 0.0
  %84 = vmatpush1.msra.mxu0 0.0
  %85 = vmatprep.subr.mxu0 0.0
  %86 = vmatpush1.msra.mxu0 0.0
  %87 = vmatprep.subr.mxu0 0.0
  %88 = vmatpush1.msra.mxu0 0.0
  %89 = vmatprep.subr.mxu0 0.0
  %90 = vmatpush1.msra.mxu0 0.0
  %91 = vmatprep.subr.mxu0 0.0
  %92 = vmatpush1.msra.mxu0 0.0
  %93 = vmatprep.subr.mxu0 0.0
  %94 = vmatpush1.msra.mxu0 0.0
  %95 = vmatprep.subr.mxu0 0.0
  %96 = vmatpush1.msra.mxu0 0.0
  %97 = vmatprep.subr.mxu0 0.0
  %98 = vmatpush1.msra.mxu0 0.0
  %99 = vmatprep.subr.mxu0 0.0
  %100 = vmatpush1.msra.mxu0 0.0
  %101 = vmatprep.subr.mxu0 0.0
  %102 = vmatpush1.msra.mxu0 0.0
  %103 = vmatprep.subr.mxu0 0.0
  %104 = vmatpush1.msra.mxu0 0.0
  %105 = vmatprep.subr.mxu0 0.0
  %106 = vmatpush1.msra.mxu0 0.0
  %107 = vmatprep.subr.mxu0 0.0
  %108 = vmatpush1.msra.mxu0 0.0
  %109 = vmatprep.subr.mxu0 0.0
  %110 = vmatpush1.msra.mxu0 0.0
  %111 = vmatprep.mubr.f32.mxu0 0.0
  %112 = vmatmul.mubr.f32.gmra.mrb[0].mxu0 %v33
  %v113 = vpop.f32.mrb[0].mxu0
  %v114 = vadd.f32 0.0, %v113
  %v115 = vpop.f32.mrb[0].mxu0
  %116 = vmatprep.mubr.f32.mxu0 0.0
  %117 = vmatmul.mubr.f32.gmra.mrb[0].mxu0 %v36
  %v118 = vpop.f32.mrb[0].mxu0
  %v119 = vadd.f32 0.0, %v118
  %v120 = vpop.f32.mrb[0].mxu0
  %121 = vmatprep.mubr.f32.mxu0 0.0
  %122 = vmatmul.mubr.f32.gmra.mrb[0].mxu0 %v39
  %v123 = vpop.f32.mrb[0].mxu0
  %v124 = vadd.f32 0.0, %v123
  %v125 = vpop.f32.mrb[0].mxu0
  %126 = vmatprep.mubr.f32.mxu0 0.0
  %127 = vmatmul.mubr.f32.gmra.mrb[0].mxu0 %v42
  %v128 = vpop.f32.mrb[0].mxu0
  %v129 = vadd.f32 0.0, %v128
  %v130 = vpop.f32.mrb[0].mxu0
  %131 = vmatprep.mubr.f32.mxu0 0.0
  %132 = vmatmul.mubr.f32.gmra.mrb[0].mxu0 %v45
  %v133 = vpop.f32.mrb[0].mxu0
  %v134 = vadd.f32 0.0, %v133
  %v135 = vpop.f32.mrb[0].mxu0
  %136 = vdwg.mxu0
  %v137 = vld [vmem:[%s1] sm:$0xff]
  %v138 = vld [vmem:[%s1 + $0x8] sm:$0xff]
  %v139 = vld [vmem:[%s1 + $0x10] sm:$0xff]
  %v140 = vld [vmem:[%s1 + $0x18] sm:$0xff]
  %v141 = vld [vmem:[%s1 + $0x20] sm:$0xff]
  %v142 = vmul.f32 %v114, %v137
  %v143 = vmul.f32 %v119, %v138
  %v144 = vmul.f32 %v124, %v139
  %v145 = vmul.f32 %v129, %v140
  %v146 = vmul.f32 %v134, %v141
  %v147 = vld [vmem:[%s3] sm:$0xff]
  %v148 = vld [vmem:[%s3 + $0x8] sm:$0xff]
  %v149 = vld [vmem:[%s3 + $0x10] sm:$0xff]
  %v150 = vld [vmem:[%s3 + $0x18] sm:$0xff]
  %v151 = vld [vmem:[%s3 + $0x20] sm:$0xff]
  %v152 = vld [vmem:[%s3 + $0x28] sm:$0xff]
  %v153 = vld [vmem:[%s4] sm:$0xff]
  %v154 = vld [vmem:[%s4 + $0x8] sm:$0xff]
  %v155 = vld [vmem:[%s4 + $0x10] sm:$0xff]
  %v156 = vld [vmem:[%s4 + $0x18] sm:$0xff]
  %v157 = vld [vmem:[%s4 + $0x20] sm:$0xff]
  %v158 = vld [vmem:[%s4 + $0x28] sm:$0xff]
  %159 = vmatprep.subr.mxu0 0.0
  %160 = vmatpush1.msra.mxu0 %v153
  %161 = vmatprep.subr.mxu0 0.0
  %162 = vmatpush1.msra.mxu0 %v154
  %163 = vmatprep.subr.mxu0 0.0
  %164 = vmatpush1.msra.mxu0 %v155
  %165 = vmatprep.subr.mxu0 0.0
  %166 = vmatpush1.msra.mxu0 %v156
  %167 = vmatprep.subr.mxu0 0.0
  %168 = vmatpush1.msra.mxu0 %v157
  %169 = vmatprep.subr.mxu0 0.0
  %170 = vmatpush1.msra.mxu0 %v158
  %171 = vmatprep.subr.mxu0 0.0
  %172 = vmatpush1.msra.mxu0 0.0
  %173 = vmatprep.subr.mxu0 0.0
  %174 = vmatpush1.msra.mxu0 0.0
  %175 = vmatprep.subr.mxu0 0.0
  %176 = vmatpush1.msra.mxu0 0.0
  %177 = vmatprep.subr.mxu0 0.0
  %178 = vmatpush1.msra.mxu0 0.0
  %179 = vmatprep.subr.mxu0 0.0
  %180 = vmatpush1.msra.mxu0 0.0
  %181 = vmatprep.subr.mxu0 0.0
  %182 = vmatpush1.msra.mxu0 0.0
  %183 = vmatprep.subr.mxu0 0.0
  %184 = vmatpush1.msra.mxu0 0.0
  %185 = vmatprep.subr.mxu0 0.0
  %186 = vmatpush1.msra.mxu0 0.0
  %187 = vmatprep.subr.mxu0 0.0
  %188 = vmatpush1.msra.mxu0 0.0
  %189 = vmatprep.subr.mxu0 0.0
  %190 = vmatpush1.msra.mxu0 0.0
  %191 = vmatprep.subr.mxu0 0.0
  %192 = vmatpush1.msra.mxu0 0.0
  %193 = vmatprep.subr.mxu0 0.0
  %194 = vmatpush1.msra.mxu0 0.0
  %195 = vmatprep.subr.mxu0 0.0
  %196 = vmatpush1.msra.mxu0 0.0
  %197 = vmatprep.subr.mxu0 0.0
  %198 = vmatpush1.msra.mxu0 0.0
  %199 = vmatprep.subr.mxu0 0.0
  %200 = vmatpush1.msra.mxu0 0.0
  %201 = vmatprep.subr.mxu0 0.0
  %202 = vmatpush1.msra.mxu0 0.0
  %203 = vmatprep.subr.mxu0 0.0
  %204 = vmatpush1.msra.mxu0 0.0
  %205 = vmatprep.subr.mxu0 0.0
  %206 = vmatpush1.msra.mxu0 0.0
  %207 = vmatprep.subr.mxu0 0.0
  %208 = vmatpush1.msra.mxu0 0.0
  %209 = vmatprep.subr.mxu0 0.0
  %210 = vmatpush1.msra.mxu0 0.0
  %211 = vmatprep.subr.mxu0 0.0
  %212 = vmatpush1.msra.mxu0 0.0
  %213 = vmatprep.subr.mxu0 0.0
  %214 = vmatpush1.msra.mxu0 0.0
  %215 = vmatprep.subr.mxu0 0.0
  %216 = vmatpush1.msra.mxu0 0.0
  %217 = vmatprep.subr.mxu0 0.0
  %218 = vmatpush1.msra.mxu0 0.0
  %219 = vmatprep.subr.mxu0 0.0
  %220 = vmatpush1.msra.mxu0 0.0
  %221 = vmatprep.subr.mxu0 0.0
  %222 = vmatpush1.msra.mxu0 0.0
  %223 = vmatprep.mubr.f32.mxu0 0.0
  %224 = vmatmul.mubr.f32.gmra.mrb[0].mxu0 %v33
  %v225 = vpop.f32.mrb[0].mxu0
  %v226 = vadd.f32 0.0, %v225
  %v227 = vpop.f32.mrb[0].mxu0
  %228 = vmatprep.mubr.f32.mxu0 0.0
  %229 = vmatmul.mubr.f32.gmra.mrb[0].mxu0 %v36
  %v230 = vpop.f32.mrb[0].mxu0
  %v231 = vadd.f32 0.0, %v230
  %v232 = vpop.f32.mrb[0].mxu0
  %233 = vmatprep.mubr.f32.mxu0 0.0
  %234 = vmatmul.mubr.f32.gmra.mrb[0].mxu0 %v39
  %v235 = vpop.f32.mrb[0].mxu0
  %v236 = vadd.f32 0.0, %v235
  %v237 = vpop.f32.mrb[0].mxu0
  %238 = vmatprep.mubr.f32.mxu0 0.0
  %239 = vmatmul.mubr.f32.gmra.mrb[0].mxu0 %v42
  %v240 = vpop.f32.mrb[0].mxu0
  %v241 = vadd.f32 0.0, %v240
  %v242 = vpop.f32.mrb[0].mxu0
  %243 = vmatprep.mubr.f32.mxu0 0.0
  %244 = vmatmul.mubr.f32.gmra.mrb[0].mxu0 %v45
  %v245 = vpop.f32.mrb[0].mxu0
  %v246 = vadd.f32 0.0, %v245
  %v247 = vpop.f32.mrb[0].mxu0
  %248 = vdwg.mxu0
  %v250 = vsel %vm31, %v142, 0
  %v253 = vsel %vm31, %v143, 0
  %v256 = vsel %vm31, %v144, 0
  %v259 = vsel %vm31, %v145, 0
  %v262 = vsel %vm31, %v146, 0
  %264 = vmatprep.subr.mxu0 0.0
  %265 = vmatpush1.msra.mxu0 %v147
  %266 = vmatprep.subr.mxu0 0.0
  %267 = vmatpush1.msra.mxu0 %v148
  %268 = vmatprep.subr.mxu0 0.0
  %269 = vmatpush1.msra.mxu0 %v149
  %270 = vmatprep.subr.mxu0 0.0
  %271 = vmatpush1.msra.mxu0 %v150
  %272 = vmatprep.subr.mxu0 0.0
  %273 = vmatpush1.msra.mxu0 %v151
  %274 = vmatprep.subr.mxu0 0.0
  %275 = vmatpush1.msra.mxu0 %v152
  %276 = vmatprep.subr.mxu0 0.0
  %277 = vmatpush1.msra.mxu0 0.0
  %278 = vmatprep.subr.mxu0 0.0
  %279 = vmatpush1.msra.mxu0 0.0
  %280 = vmatprep.subr.mxu0 0.0
  %281 = vmatpush1.msra.mxu0 0.0
  %282 = vmatprep.subr.mxu0 0.0
  %283 = vmatpush1.msra.mxu0 0.0
  %284 = vmatprep.subr.mxu0 0.0
  %285 = vmatpush1.msra.mxu0 0.0
  %286 = vmatprep.subr.mxu0 0.0
  %287 = vmatpush1.msra.mxu0 0.0
  %288 = vmatprep.subr.mxu0 0.0
  %289 = vmatpush1.msra.mxu0 0.0
  %290 = vmatprep.subr.mxu0 0.0
  %291 = vmatpush1.msra.mxu0 0.0
  %292 = vmatprep.subr.mxu0 0.0
  %293 = vmatpush1.msra.mxu0 0.0
  %294 = vmatprep.subr.mxu0 0.0
  %295 = vmatpush1.msra.mxu0 0.0
  %296 = vmatprep.subr.mxu0 0.0
  %297 = vmatpush1.msra.mxu0 0.0
  %298 = vmatprep.subr.mxu0 0.0
  %299 = vmatpush1.msra.mxu0 0.0
  %300 = vmatprep.subr.mxu0 0.0
  %301 = vmatpush1.msra.mxu0 0.0
  %302 = vmatprep.subr.mxu0 0.0
  %303 = vmatpush1.msra.mxu0 0.0
  %304 = vmatprep.subr.mxu0 0.0
  %305 = vmatpush1.msra.mxu0 0.0
  %306 = vmatprep.subr.mxu0 0.0
  %307 = vmatpush1.msra.mxu0 0.0
  %308 = vmatprep.subr.mxu0 0.0
  %309 = vmatpush1.msra.mxu0 0.0
  %310 = vmatprep.subr.mxu0 0.0
  %311 = vmatpush1.msra.mxu0 0.0
  %312 = vmatprep.subr.mxu0 0.0
  %313 = vmatpush1.msra.mxu0 0.0
  %314 = vmatprep.subr.mxu0 0.0
  %315 = vmatpush1.msra.mxu0 0.0
  %316 = vmatprep.subr.mxu0 0.0
  %317 = vmatpush1.msra.mxu0 0.0
  %318 = vmatprep.subr.mxu0 0.0
  %319 = vmatpush1.msra.mxu0 0.0
  %320 = vmatprep.subr.mxu0 0.0
  %321 = vmatpush1.msra.mxu0 0.0
  %322 = vmatprep.subr.mxu0 0.0
  %323 = vmatpush1.msra.mxu0 0.0
  %324 = vmatprep.subr.mxu0 0.0
  %325 = vmatpush1.msra.mxu0 0.0
  %326 = vmatprep.subr.mxu0 0.0
  %327 = vmatpush1.msra.mxu0 0.0
  %328 = vmatprep.mubr.f32.mxu0 0.0
  %329 = vmatmul.mubr.f32.gmra.mrb[0].mxu0 %v250
  %v330 = vpop.f32.mrb[0].mxu0
  %v331 = vadd.f32 %v226, %v330
  %v332 = vpop.f32.mrb[0].mxu0
  %333 = vmatprep.mubr.f32.mxu0 0.0
  %334 = vmatmul.mubr.f32.gmra.mrb[0].mxu0 %v253
  %v335 = vpop.f32.mrb[0].mxu0
  %v336 = vadd.f32 %v231, %v335
  %v337 = vpop.f32.mrb[0].mxu0
  %338 = vmatprep.mubr.f32.mxu0 0.0
  %339 = vmatmul.mubr.f32.gmra.mrb[0].mxu0 %v256
  %v340 = vpop.f32.mrb[0].mxu0
  %v341 = vadd.f32 %v236, %v340
  %v342 = vpop.f32.mrb[0].mxu0
  %343 = vmatprep.mubr.f32.mxu0 0.0
  %344 = vmatmul.mubr.f32.gmra.mrb[0].mxu0 %v259
  %v345 = vpop.f32.mrb[0].mxu0
  %v346 = vadd.f32 %v241, %v345
  %v347 = vpop.f32.mrb[0].mxu0
  %348 = vmatprep.mubr.f32.mxu0 0.0
  %349 = vmatmul.mubr.f32.gmra.mrb[0].mxu0 %v262
  %v350 = vpop.f32.mrb[0].mxu0
  %v351 = vadd.f32 %v246, %v350
  %v352 = vpop.f32.mrb[0].mxu0
  %353 = vdwg.mxu0
  %354 = vst.msk [vmem:[%s5] sm:$0xff] %vm31, %v331
  %355 = vst.msk [vmem:[%s5 + $0x8] sm:$0xff] %vm31, %v336
  %356 = vst.msk [vmem:[%s5 + $0x10] sm:$0xff] %vm31, %v341
  %357 = vst.msk [vmem:[%s5 + $0x18] sm:$0xff] %vm31, %v346
  %358 = vst.msk [vmem:[%s5 + $0x20] sm:$0xff] %vm31, %v351
  // Predicated region
  $region22: #{bl_generator_forward.3} parent=0 // pred_check
    _
  $region23: #{bl_generator_forward.3} parent=0 // pred_check_branch
    %360 = sbr.rel (0) target = $region25
  $region24: #{bl_generator_forward.3} parent=0 // pred_region
    _
  $region25: #{bl_generator_forward.3} parent=0 // pred_fallthru
    _
  // Predicated region
  $region26: #{bl_generator_forward.3} parent=0 // pred_check
    _
  $region27: #{bl_generator_forward.3} parent=0 // pred_check_branch
    %362 = sbr.rel (0) target = $region29
  $region28: #{bl_generator_forward.3} parent=0 // pred_region
    _
  $region29: #{bl_generator_forward.3} parent=0 // pred_fallthru
    _

// kernel: bl_generator_forward.2
$region0: #{bl_generator_forward.2}
  #allocation0 [shape = 'u32[]', space=smem, size = 0x4, offset = 0x4, fixed_abs, tag = 'smem constant byte address 0x4 - core index']
  #allocation1 [shape = 'u32[144,128]{1,0:T(1,128)}', space=vmem, size = 0x12000, scoped, tag = 'internal scratch']
  %s0 = inlined_call_operand.vmem [shape: f32[8,128], index: 0, kind: input, shape index: {}]
  %s1 = inlined_call_operand.vmem [shape: f32[8,1], index: 1, kind: input, shape index: {}]
  %s2 = inlined_call_operand.vmem [shape: bf16[128,256], index: 2, kind: input, shape index: {}]
  %s3 = inlined_call_operand.vmem [shape: f32[1,256], index: 3, kind: input, shape index: {}]
  %s4 = inlined_call_operand.vmem [shape: f32[1,256], index: 4, kind: input, shape index: {}]
  %s5 = inlined_call_operand.vmem [shape: f32[1,256], index: 5, kind: input, shape index: {}]
  %s6 = inlined_call_operand.hbm [shape: bf16[4,256,256], index: 6, kind: input, shape index: {}]
  %s7 = inlined_call_operand.vmem [shape: f32[4,1,256], index: 7, kind: input, shape index: {}]
  %s8 = inlined_call_operand.vmem [shape: f32[4,1,256], index: 8, kind: input, shape index: {}]
  %s9 = inlined_call_operand.vmem [shape: f32[4,1,256], index: 9, kind: input, shape index: {}]
  %s10 = inlined_call_operand.vmem [shape: bf16[256,128], index: 10, kind: input, shape index: {}]
  %s11 = inlined_call_operand.vmem [shape: f32[1,128], index: 11, kind: input, shape index: {}]
  %s12 = inlined_call_operand.vmem [shape: f32[1,128], index: 12, kind: input, shape index: {}]
  %s13 = inlined_call_operand.vmem [shape: f32[128,48], index: 13, kind: input, shape index: {}]
  %s14 = inlined_call_operand.vmem [shape: f32[8,128], index: 14, kind: output, shape index: {0}]
  %s15 = inlined_call_operand.vmem [shape: f32[8,48], index: 15, kind: output, shape index: {1}]
  %16 = xla_tuple %s14, %s15
  %s17 = sld [smem:[#allocation0]]
  $region78: #{bl_generator_forward.2} parent=0
    _
  %s19 = ssub.s32 1, %s17
  %s20 = scalar_select 0, %s19, %s17
  $region1: #{bl_generator_forward.2} parent=0
    #allocation2 [shape = 'u8[524288]{0}', space=vmem, size = 0x80000, scoped, tag = 'input window, operand 6, single buffered']
    #allocation3 [shape = 's32[1]{0}', space=sflag, size = 0x4, scoped, tag = 'scoped memory for bl_generator_forward.2']
    %21 = vsyncpa [#allocation3], 0
    // Predicated region
    $region2: #{bl_generator_forward.2} parent=1 // pred_check
      _
    $region3: #{bl_generator_forward.2} parent=1 // pred_check_branch
      %23 = sbr.rel (0) target = $region5
    $region4: #{bl_generator_forward.2} parent=1 // pred_region
      _
    $region5: #{bl_generator_forward.2} parent=1 // pred_fallthru
      _
    // Predicated region
    $region6: #{bl_generator_forward.2} parent=1 // pred_check
      _
    $region7: #{bl_generator_forward.2} parent=1 // pred_check_branch
      %25 = sbr.rel (0) target = $region9
    $region8: #{bl_generator_forward.2} parent=1 // pred_region
      _
    $region9: #{bl_generator_forward.2} parent=1 // pred_fallthru
      _
    // Predicated region
    $region10: #{bl_generator_forward.2} parent=1 // pred_check
      _
    $region11: #{bl_generator_forward.2} parent=1 // pred_check_branch
      %27 = sbr.rel (0) target = $region13
    $region12: #{bl_generator_forward.2} parent=1 // pred_region
      _
    $region13: #{bl_generator_forward.2} parent=1 // pred_fallthru
      _
    // Predicated region
    $region14: #{bl_generator_forward.2} parent=1 // pred_check
      _
    $region15: #{bl_generator_forward.2} parent=1 // pred_check_branch
      %29 = sbr.rel (0) target = $region17
    $region16: #{bl_generator_forward.2} parent=1 // pred_region
      _
    $region17: #{bl_generator_forward.2} parent=1 // pred_fallthru
      _
    // Predicated region
    $region18: #{bl_generator_forward.2} parent=1 // pred_check
      _
    $region19: #{bl_generator_forward.2} parent=1 // pred_check_branch
      %31 = sbr.rel (0) target = $region21
    $region20: #{bl_generator_forward.2} parent=1 // pred_region
      _
    $region21: #{bl_generator_forward.2} parent=1 // pred_fallthru
      _
    // Predicated region
    $region22: #{bl_generator_forward.2} parent=1 // pred_check
      _
    $region23: #{bl_generator_forward.2} parent=1 // pred_check_branch
      %33 = sbr.rel (0) target = $region25
    $region24: #{bl_generator_forward.2} parent=1 // pred_region
      _
    $region25: #{bl_generator_forward.2} parent=1 // pred_fallthru
      _
    // Predicated region
    $region26: #{bl_generator_forward.2} parent=1 // pred_check
      _
    $region27: #{bl_generator_forward.2} parent=1 // pred_check_branch
      %35 = sbr.rel (0) target = $region29
    $region28: #{bl_generator_forward.2} parent=1 // pred_region
      %s37 = ssub.s32 16384, 16384
      %38 = vsyncadd [#allocation3], %s37
      %s39 = sshll.u32 [#allocation2], 4
      %s40 = int_to_ptr.vmem [resolvable:$true] %s39
      %45 = dma.hbm_to_vmem [thread:$0]  %s6, 16384, %s40, [#allocation3], 128, 128, 8
    $region29: #{bl_generator_forward.2} parent=1 // pred_fallthru
      _
    // Predicated region
    $region30: #{bl_generator_forward.2} parent=1 // pred_check
      _
    $region31: #{bl_generator_forward.2} parent=1 // pred_check_branch
      %47 = sbr.rel (0) target = $region33
    $region32: #{bl_generator_forward.2} parent=1 // pred_region
      _
    $region33: #{bl_generator_forward.2} parent=1 // pred_fallthru
      _
    // Predicated region
    $region34: #{bl_generator_forward.2} parent=1 // pred_check
      _
    $region35: #{bl_generator_forward.2} parent=1 // pred_check_branch
      %49 = sbr.rel (0) target = $region37
    $region36: #{bl_generator_forward.2} parent=1 // pred_region
      _
    $region37: #{bl_generator_forward.2} parent=1 // pred_fallthru
      _
    // Predicated region
    $region38: #{bl_generator_forward.2} parent=1 // pred_check
      _
    $region39: #{bl_generator_forward.2} parent=1 // pred_check_branch
      %51 = sbr.rel (0) target = $region41
    $region40: #{bl_generator_forward.2} parent=1 // pred_region
      _
    $region41: #{bl_generator_forward.2} parent=1 // pred_fallthru
      _
    // Predicated region
    $region42: #{bl_generator_forward.2} parent=1 // pred_check
      _
    $region43: #{bl_generator_forward.2} parent=1 // pred_check_branch
      %53 = sbr.rel (0) target = $region45
    $region44: #{bl_generator_forward.2} parent=1 // pred_region
      _
    $region45: #{bl_generator_forward.2} parent=1 // pred_fallthru
      _
    // Predicated region
    $region46: #{bl_generator_forward.2} parent=1 // pred_check
      _
    $region47: #{bl_generator_forward.2} parent=1 // pred_check_branch
      %55 = sbr.rel (0) target = $region49
    $region48: #{bl_generator_forward.2} parent=1 // pred_region
      _
    $region49: #{bl_generator_forward.2} parent=1 // pred_fallthru
      _
    // Predicated region
    $region50: #{bl_generator_forward.2} parent=1 // pred_check
      _
    $region51: #{bl_generator_forward.2} parent=1 // pred_check_branch
      %57 = sbr.rel (0) target = $region53
    $region52: #{bl_generator_forward.2} parent=1 // pred_region
      _
    $region53: #{bl_generator_forward.2} parent=1 // pred_fallthru
      _
    // Predicated region
    $region54: #{bl_generator_forward.2} parent=1 // pred_check
      _
    $region55: #{bl_generator_forward.2} parent=1 // pred_check_branch
      %59 = sbr.rel (0) target = $region57
    $region56: #{bl_generator_forward.2} parent=1 // pred_region
      _
    $region57: #{bl_generator_forward.2} parent=1 // pred_fallthru
      _
    // Predicated region
    $region58: #{bl_generator_forward.2} parent=1 // pred_check
      _
    $region59: #{bl_generator_forward.2} parent=1 // pred_check_branch
      %61 = sbr.rel (0) target = $region61
    $region60: #{bl_generator_forward.2} parent=1 // pred_region
      %62 = dma.done [#allocation3], 16384
    $region61: #{bl_generator_forward.2} parent=1 // pred_fallthru
      _
    %v64 = vld [vmem:[%s1] sm:$0xff]
    %vm65 = vcmask 7168
    %v66 = vsel %vm65, %v64, 0.0
    %67 = vadd.xlane.f32.xlu0 %v66
    %v68 = vpop.xlane.xlu0 %67
    %v69 = vrot.slane %v68, 4
    %v70 = vadd.f32 %v68, %v69
    %v71 = vrot.slane %v70, 2
    %v72 = vadd.f32 %v70, %v71
    %v73 = vrot.slane %v72, 1
    %v74 = vadd.f32 %v72, %v73
    %s75 = vtos %v74
    %v76 = vld [vmem:[%s0] sm:$0xff]
    %v77 = vpack.c.bf16 %v76, %v76
    %v78 = vld [vmem:[%s2] sm:$0xff]
    %v79 = vld [vmem:[%s2 + $0x8] sm:$0xff]
    %v80 = vld [vmem:[%s2 + $0x10] sm:$0xff]
    %v81 = vld [vmem:[%s2 + $0x18] sm:$0xff]
    %v82 = vld [vmem:[%s2 + $0x20] sm:$0xff]
    %v83 = vld [vmem:[%s2 + $0x28] sm:$0xff]
    %v84 = vld [vmem:[%s2 + $0x30] sm:$0xff]
    %v85 = vld [vmem:[%s2 + $0x38] sm:$0xff]
    %v86 = vld [vmem:[%s2 + $0x40] sm:$0xff]
    %v87 = vld [vmem:[%s2 + $0x48] sm:$0xff]
    %v88 = vld [vmem:[%s2 + $0x50] sm:$0xff]
    %v89 = vld [vmem:[%s2 + $0x58] sm:$0xff]
    %v90 = vld [vmem:[%s2 + $0x60] sm:$0xff]
    %v91 = vld [vmem:[%s2 + $0x68] sm:$0xff]
    %v92 = vld [vmem:[%s2 + $0x70] sm:$0xff]
    %v93 = vld [vmem:[%s2 + $0x78] sm:$0xff]
    %v94 = vld [vmem:[%s3] sm:$0x3]
    %v96 = vlaneseq
    %v97 = vshrl.u32 %v96, 7
    %v98 = vsub.s32 0, %v97
    %v99 = vrot.slane %v94, %v98
    %v100 = vlaneseq
    %v101 = vshrl.u32 %v100, 7
    %v102 = vsub.s32 1, %v101
    %v103 = vrot.slane %v94, %v102
    %v122 = vunpack.c.l.b16 %v78
    %v123 = vunpack.c.h.b16 %v78
    %v124 = vunpack.c.l.b16 %v79
    %v125 = vunpack.c.h.b16 %v79
    %v126 = vunpack.c.l.b16 %v80
    %v127 = vunpack.c.h.b16 %v80
    %v128 = vunpack.c.l.b16 %v81
    %v129 = vunpack.c.h.b16 %v81
    %v130 = vunpack.c.l.b16 %v82
    %v131 = vunpack.c.h.b16 %v82
    %v132 = vunpack.c.l.b16 %v83
    %v133 = vunpack.c.h.b16 %v83
    %v134 = vunpack.c.l.b16 %v84
    %v135 = vunpack.c.h.b16 %v84
    %v136 = vunpack.c.l.b16 %v85
    %v137 = vunpack.c.h.b16 %v85
    %v138 = vunpack.c.l.b16 %v86
    %v139 = vunpack.c.h.b16 %v86
    %v140 = vunpack.c.l.b16 %v87
    %v141 = vunpack.c.h.b16 %v87
    %v142 = vunpack.c.l.b16 %v88
    %v143 = vunpack.c.h.b16 %v88
    %v144 = vunpack.c.l.b16 %v89
    %v145 = vunpack.c.h.b16 %v89
    %v146 = vunpack.c.l.b16 %v90
    %v147 = vunpack.c.h.b16 %v90
    %v148 = vunpack.c.l.b16 %v91
    %v149 = vunpack.c.h.b16 %v91
    %v150 = vunpack.c.l.b16 %v92
    %v151 = vunpack.c.h.b16 %v92
    %v152 = vunpack.c.l.b16 %v93
    %v153 = vunpack.c.h.b16 %v93
    %v154 = vpack.c.b16 %v124, %v122
    %v155 = vpack.c.b16 %v125, %v123
    %v156 = vpack.c.b16 %v128, %v126
    %v157 = vpack.c.b16 %v129, %v127
    %v158 = vpack.c.b16 %v132, %v130
    %v159 = vpack.c.b16 %v133, %v131
    %v160 = vpack.c.b16 %v136, %v134
    %v161 = vpack.c.b16 %v137, %v135
    %v162 = vpack.c.b16 %v140, %v138
    %v163 = vpack.c.b16 %v141, %v139
    %v164 = vpack.c.b16 %v144, %v142
    %v165 = vpack.c.b16 %v145, %v143
    %v166 = vpack.c.b16 %v148, %v146
    %v167 = vpack.c.b16 %v149, %v147
    %v168 = vpack.c.b16 %v152, %v150
    %v169 = vpack.c.b16 %v153, %v151
    %186 = vmatprep.subr.bf16.mxu0 %v155
    %187 = vmatpush1.bf16.msra.mxu0 %v154
    %188 = vmatprep.subr.bf16.mxu0 %v157
    %189 = vmatpush1.bf16.msra.mxu0 %v156
    %190 = vmatprep.subr.bf16.mxu0 %v159
    %191 = vmatpush1.bf16.msra.mxu0 %v158
    %192 = vmatprep.subr.bf16.mxu0 %v161
    %193 = vmatpush1.bf16.msra.mxu0 %v160
    %194 = vmatprep.subr.bf16.mxu0 %v163
    %195 = vmatpush1.bf16.msra.mxu0 %v162
    %196 = vmatprep.subr.bf16.mxu0 %v165
    %197 = vmatpush1.bf16.msra.mxu0 %v164
    %198 = vmatprep.subr.bf16.mxu0 %v167
    %199 = vmatpush1.bf16.msra.mxu0 %v166
    %200 = vmatprep.subr.bf16.mxu0 %v169
    %201 = vmatpush1.bf16.msra.mxu0 %v168
    %202 = vmatprep.subr.bf16.mxu0 0
    %203 = vmatpush1.bf16.msra.mxu0 0
    %204 = vmatprep.subr.bf16.mxu0 0
    %205 = vmatpush1.bf16.msra.mxu0 0
    %206 = vmatprep.subr.bf16.mxu0 0
    %207 = vmatpush1.bf16.msra.mxu0 0
    %208 = vmatprep.subr.bf16.mxu0 0
    %209 = vmatpush1.bf16.msra.mxu0 0
    %210 = vmatprep.subr.bf16.mxu0 0
    %211 = vmatpush1.bf16.msra.mxu0 0
    %212 = vmatprep.subr.bf16.mxu0 0
    %213 = vmatpush1.bf16.msra.mxu0 0
    %214 = vmatprep.subr.bf16.mxu0 0
    %215 = vmatpush1.bf16.msra.mxu0 0
    %216 = vmatprep.subr.bf16.mxu0 0
    %217 = vmatpush1.bf16.msra.mxu0 0
    %218 = vmatprep.mubr.bf16.mxu0 0
    %219 = vmatmul.mubr.bf16.gmra.mrb[0].mxu0 %v77
    %v220 = vpop.f32.mrb[0].mxu0
    %v221 = vadd.f32 %v99, %v220
    %v222 = vpop.f32.mrb[0].mxu0
    %v223 = vadd.f32 %v103, %v222
    %v224 = vpop.f32.mrb[0].mxu0
    %v225 = vpop.f32.mrb[0].mxu0
    %226 = vdwg.mxu0
    %v227 = vld [vmem:[%s4] sm:$0x3]
    %v228 = vld [vmem:[%s5] sm:$0x3]
    %230 = vset.pattern.permute.xlu0 0
    %231 = vperm.xlu0 %230, %v64
    %v232 = vpop.permute.xlu0 %231
    %v234 = vmul.f32 %v221, %v232
    %v235 = vmul.f32 %v223, %v232
    %v236 = vrot.slane %v234, 4
    %v237 = vadd.f32 %v234, %v236
    %v238 = vrot.slane %v237, 2
    %v239 = vadd.f32 %v237, %v238
    %v240 = vrot.slane %v239, 1
    %v241 = vadd.f32 %v239, %v240
    %v242 = vrot.slane %v235, 4
    %v243 = vadd.f32 %v235, %v242
    %v244 = vrot.slane %v243, 2
    %v245 = vadd.f32 %v243, %v244
    %v246 = vrot.slane %v245, 1
    %v247 = vadd.f32 %v245, %v246
    %v248 = vstv %s75
    %v249 = vrcp.pop %v248
    %v250 = vmul.f32 %v241, %v249
    %v251 = vmul.f32 %v247, %v249
    %v252 = vsub.f32 %v221, %v250
    %v253 = vsub.f32 %v223, %v251
    %v254 = vmul.f32 %v252, %v252
    %v255 = vmul.f32 %v253, %v253
    %v256 = vmul.f32 %v254, %v232
    %v257 = vmul.f32 %v255, %v232
    %v258 = vrot.slane %v256, 4
    %v259 = vadd.f32 %v256, %v258
    %v260 = vrot.slane %v259, 2
    %v261 = vadd.f32 %v259, %v260
    %v262 = vrot.slane %v261, 1
    %v263 = vadd.f32 %v261, %v262
    %v264 = vrot.slane %v257, 4
    %v265 = vadd.f32 %v257, %v264
    %v266 = vrot.slane %v265, 2
    %v267 = vadd.f32 %v265, %v266
    %v268 = vrot.slane %v267, 1
    %v269 = vadd.f32 %v267, %v268
    %v270 = vmul.f32 %v263, %v249
    %v271 = vmul.f32 %v269, %v249
    %v272 = vadd.f32 %v270, 1e-05
    %v273 = vadd.f32 %v271, 1e-05
    %v274 = vrsqrt.pop %v272
    %v275 = vrsqrt.pop %v273
    %v276 = vmul.f32 %v252, %v274
    %v277 = vmul.f32 %v253, %v275
    %v279 = vlaneseq
    %v280 = vshrl.u32 %v279, 7
    %v281 = vsub.s32 0, %v280
    %v282 = vrot.slane %v227, %v281
    %v283 = vlaneseq
    %v284 = vshrl.u32 %v283, 7
    %v285 = vsub.s32 1, %v284
    %v286 = vrot.slane %v227, %v285
    %v289 = vmul.f32 %v276, %v282
    %v290 = vmul.f32 %v277, %v286
    %v292 = vlaneseq
    %v293 = vshrl.u32 %v292, 7
    %v294 = vsub.s32 0, %v293
    %v295 = vrot.slane %v228, %v294
    %v296 = vlaneseq
    %v297 = vshrl.u32 %v296, 7
    %v298 = vsub.s32 1, %v297
    %v299 = vrot.slane %v228, %v298
    %v302 = vadd.f32 %v289, %v295
    %v303 = vadd.f32 %v290, %v299
    %vm304 = vcmp.gt.f32.partialorder %v302, 0.0
    %vm305 = vcmp.gt.f32.partialorder %v303, 0.0
    %v306 = vmul.f32 %v302, 0.01
    %v307 = vmul.f32 %v303, 0.01
    %v308 = vsel %vm304, %v302, %v306
    %v309 = vsel %vm305, %v303, %v307
    %v310 = vpack.c.bf16 %v308, %v308
    %v311 = vpack.c.bf16 %v309, %v309
    %v312 = vld [vmem:[#allocation2] sm:$0xff]
    %v313 = vld [vmem:[#allocation2 + $0x8] sm:$0xff]
    %v314 = vld [vmem:[#allocation2 + $0x10] sm:$0xff]
    %v315 = vld [vmem:[#allocation2 + $0x18] sm:$0xff]
    %v316 = vld [vmem:[#allocation2 + $0x20] sm:$0xff]
    %v317 = vld [vmem:[#allocation2 + $0x28] sm:$0xff]
    %v318 = vld [vmem:[#allocation2 + $0x30] sm:$0xff]
    %v319 = vld [vmem:[#allocation2 + $0x38] sm:$0xff]
    %v320 = vld [vmem:[#allocation2 + $0x40] sm:$0xff]
    %v321 = vld [vmem:[#allocation2 + $0x48] sm:$0xff]
    %v322 = vld [vmem:[#allocation2 + $0x50] sm:$0xff]
    %v323 = vld [vmem:[#allocation2 + $0x58] sm:$0xff]
    %v324 = vld [vmem:[#allocation2 + $0x60] sm:$0xff]
    %v325 = vld [vmem:[#allocation2 + $0x68] sm:$0xff]
    %v326 = vld [vmem:[#allocation2 + $0x70] sm:$0xff]
    %v327 = vld [vmem:[#allocation2 + $0x78] sm:$0xff]
    %v328 = vld [vmem:[#allocation2 + $0x80] sm:$0xff]
    %v329 = vld [vmem:[#allocation2 + $0x88] sm:$0xff]
    %v330 = vld [vmem:[#allocation2 + $0x90] sm:$0xff]
    %v331 = vld [vmem:[#allocation2 + $0x98] sm:$0xff]
    %v332 = vld [vmem:[#allocation2 + $0xa0] sm:$0xff]
    %v333 = vld [vmem:[#allocation2 + $0xa8] sm:$0xff]
    %v334 = vld [vmem:[#allocation2 + $0xb0] sm:$0xff]
    %v335 = vld [vmem:[#allocation2 + $0xb8] sm:$0xff]
    %v336 = vld [vmem:[#allocation2 + $0xc0] sm:$0xff]
    %v337 = vld [vmem:[#allocation2 + $0xc8] sm:$0xff]
    %v338 = vld [vmem:[#allocation2 + $0xd0] sm:$0xff]
    %v339 = vld [vmem:[#allocation2 + $0xd8] sm:$0xff]
    %v340 = vld [vmem:[#allocation2 + $0xe0] sm:$0xff]
    %v341 = vld [vmem:[#allocation2 + $0xe8] sm:$0xff]
    %v342 = vld [vmem:[#allocation2 + $0xf0] sm:$0xff]
    %v343 = vld [vmem:[#allocation2 + $0xf8] sm:$0xff]
    %v344 = vld [vmem:[%s7] sm:$0x3]
    %v346 = vlaneseq
    %v347 = vshrl.u32 %v346, 7
    %v348 = vsub.s32 0, %v347
    %v349 = vrot.slane %v344, %v348
    %v350 = vlaneseq
    %v351 = vshrl.u32 %v350, 7
    %v352 = vsub.s32 1, %v351
    %v353 = vrot.slane %v344, %v352
    %v388 = vunpack.c.l.b16 %v312
    %v389 = vunpack.c.h.b16 %v312
    %v390 = vunpack.c.l.b16 %v313
    %v391 = vunpack.c.h.b16 %v313
    %v392 = vunpack.c.l.b16 %v314
    %v393 = vunpack.c.h.b16 %v314
    %v394 = vunpack.c.l.b16 %v315
    %v395 = vunpack.c.h.b16 %v315
    %v396 = vunpack.c.l.b16 %v316
    %v397 = vunpack.c.h.b16 %v316
    %v398 = vunpack.c.l.b16 %v317
    %v399 = vunpack.c.h.b16 %v317
    %v400 = vunpack.c.l.b16 %v318
    %v401 = vunpack.c.h.b16 %v318
    %v402 = vunpack.c.l.b16 %v319
    %v403 = vunpack.c.h.b16 %v319
    %v404 = vunpack.c.l.b16 %v320
    %v405 = vunpack.c.h.b16 %v320
    %v406 = vunpack.c.l.b16 %v321
    %v407 = vunpack.c.h.b16 %v321
    %v408 = vunpack.c.l.b16 %v322
    %v409 = vunpack.c.h.b16 %v322
    %v410 = vunpack.c.l.b16 %v323
    %v411 = vunpack.c.h.b16 %v323
    %v412 = vunpack.c.l.b16 %v324
    %v413 = vunpack.c.h.b16 %v324
    %v414 = vunpack.c.l.b16 %v325
    %v415 = vunpack.c.h.b16 %v325
    %v416 = vunpack.c.l.b16 %v326
    %v417 = vunpack.c.h.b16 %v326
    %v418 = vunpack.c.l.b16 %v327
    %v419 = vunpack.c.h.b16 %v327
    %v420 = vunpack.c.l.b16 %v328
    %v421 = vunpack.c.h.b16 %v328
    %v422 = vunpack.c.l.b16 %v329
    %v423 = vunpack.c.h.b16 %v329
    %v424 = vunpack.c.l.b16 %v330
    %v425 = vunpack.c.h.b16 %v330
    %v426 = vunpack.c.l.b16 %v331
    %v427 = vunpack.c.h.b16 %v331
    %v428 = vunpack.c.l.b16 %v332
    %v429 = vunpack.c.h.b16 %v332
    %v430 = vunpack.c.l.b16 %v333
    %v431 = vunpack.c.h.b16 %v333
    %v432 = vunpack.c.l.b16 %v334
    %v433 = vunpack.c.h.b16 %v334
    %v434 = vunpack.c.l.b16 %v335
    %v435 = vunpack.c.h.b16 %v335
    %v436 = vunpack.c.l.b16 %v336
    %v437 = vunpack.c.h.b16 %v336
    %v438 = vunpack.c.l.b16 %v337
    %v439 = vunpack.c.h.b16 %v337
    %v440 = vunpack.c.l.b16 %v338
    %v441 = vunpack.c.h.b16 %v338
    %v442 = vunpack.c.l.b16 %v339
    %v443 = vunpack.c.h.b16 %v339
    %v444 = vunpack.c.l.b16 %v340
    %v445 = vunpack.c.h.b16 %v340
    %v446 = vunpack.c.l.b16 %v341
    %v447 = vunpack.c.h.b16 %v341
    %v448 = vunpack.c.l.b16 %v342
    %v449 = vunpack.c.h.b16 %v342
    %v450 = vunpack.c.l.b16 %v343
    %v451 = vunpack.c.h.b16 %v343
    %v452 = vpack.c.b16 %v390, %v388
    %v453 = vpack.c.b16 %v391, %v389
    %v454 = vpack.c.b16 %v394, %v392
    %v455 = vpack.c.b16 %v395, %v393
    %v456 = vpack.c.b16 %v398, %v396
    %v457 = vpack.c.b16 %v399, %v397
    %v458 = vpack.c.b16 %v402, %v400
    %v459 = vpack.c.b16 %v403, %v401
    %v460 = vpack.c.b16 %v406, %v404
    %v461 = vpack.c.b16 %v407, %v405
    %v462 = vpack.c.b16 %v410, %v408
    %v463 = vpack.c.b16 %v411, %v409
    %v464 = vpack.c.b16 %v414, %v412
    %v465 = vpack.c.b16 %v415, %v413
    %v466 = vpack.c.b16 %v418, %v416
    %v467 = vpack.c.b16 %v419, %v417
    %v468 = vpack.c.b16 %v422, %v420
    %v469 = vpack.c.b16 %v423, %v421
    %v470 = vpack.c.b16 %v426, %v424
    %v471 = vpack.c.b16 %v427, %v425
    %v472 = vpack.c.b16 %v430, %v428
    %v473 = vpack.c.b16 %v431, %v429
    %v474 = vpack.c.b16 %v434, %v432
    %v475 = vpack.c.b16 %v435, %v433
    %v476 = vpack.c.b16 %v438, %v436
    %v477 = vpack.c.b16 %v439, %v437
    %v478 = vpack.c.b16 %v442, %v440
    %v479 = vpack.c.b16 %v443, %v441
    %v480 = vpack.c.b16 %v446, %v444
    %v481 = vpack.c.b16 %v447, %v445
    %v482 = vpack.c.b16 %v450, %v448
    %v483 = vpack.c.b16 %v451, %v449
    %516 = vmatprep.subr.bf16.mxu0 %v453
    %517 = vmatpush1.bf16.msra.mxu0 %v452
    %518 = vmatprep.subr.bf16.mxu0 %v455
    %519 = vmatpush1.bf16.msra.mxu0 %v454
    %520 = vmatprep.subr.bf16.mxu0 %v457
    %521 = vmatpush1.bf16.msra.mxu0 %v456
    %522 = vmatprep.subr.bf16.mxu0 %v459
    %523 = vmatpush1.bf16.msra.mxu0 %v458
    %524 = vmatprep.subr.bf16.mxu0 %v461
    %525 = vmatpush1.bf16.msra.mxu0 %v460
    %526 = vmatprep.subr.bf16.mxu0 %v463
    %527 = vmatpush1.bf16.msra.mxu0 %v462
    %528 = vmatprep.subr.bf16.mxu0 %v465
    %529 = vmatpush1.bf16.msra.mxu0 %v464
    %530 = vmatprep.subr.bf16.mxu0 %v467
    %531 = vmatpush1.bf16.msra.mxu0 %v466
    %532 = vmatprep.subr.bf16.mxu0 %v469
    %533 = vmatpush1.bf16.msra.mxu0 %v468
    %534 = vmatprep.subr.bf16.mxu0 %v471
    %535 = vmatpush1.bf16.msra.mxu0 %v470
    %536 = vmatprep.subr.bf16.mxu0 %v473
    %537 = vmatpush1.bf16.msra.mxu0 %v472
    %538 = vmatprep.subr.bf16.mxu0 %v475
    %539 = vmatpush1.bf16.msra.mxu0 %v474
    %540 = vmatprep.subr.bf16.mxu0 %v477
    %541 = vmatpush1.bf16.msra.mxu0 %v476
    %542 = vmatprep.subr.bf16.mxu0 %v479
    %543 = vmatpush1.bf16.msra.mxu0 %v478
    %544 = vmatprep.subr.bf16.mxu0 %v481
    %545 = vmatpush1.bf16.msra.mxu0 %v480
    %546 = vmatprep.subr.bf16.mxu0 %v483
    %547 = vmatpush1.bf16.msra.mxu0 %v482
    %548 = vmatprep.mubr.bf16.mxu0 %v311
    %549 = vmatmul.mubr.bf16.gmra.mrb[0].mxu0 %v310
    %v550 = vpop.f32.mrb[0].mxu0
    %v551 = vadd.f32 %v349, %v550
    %v552 = vpop.f32.mrb[0].mxu0
    %v553 = vadd.f32 %v353, %v552
    %v554 = vpop.f32.mrb[0].mxu0
    %v555 = vpop.f32.mrb[0].mxu0
    %556 = vdwg.mxu0
    %v557 = vld [vmem:[%s8] sm:$0x3]
    %v558 = vld [vmem:[%s9] sm:$0x3]
    %v559 = vmul.f32 %v551, %v232
    %v560 = vmul.f32 %v553, %v232
    %v561 = vrot.slane %v559, 4
    %v562 = vadd.f32 %v559, %v561
    %v563 = vrot.slane %v562, 2
    %v564 = vadd.f32 %v562, %v563
    %v565 = vrot.slane %v564, 1
    %v566 = vadd.f32 %v564, %v565
    %v567 = vrot.slane %v560, 4
    %v568 = vadd.f32 %v560, %v567
    %v569 = vrot.slane %v568, 2
    %v570 = vadd.f32 %v568, %v569
    %v571 = vrot.slane %v570, 1
    %v572 = vadd.f32 %v570, %v571
    %v573 = vmul.f32 %v566, %v249
    %v574 = vmul.f32 %v572, %v249
    %v575 = vsub.f32 %v551, %v573
    %v576 = vsub.f32 %v553, %v574
    %v577 = vmul.f32 %v575, %v575
    %v578 = vmul.f32 %v576, %v576
    %v579 = vmul.f32 %v577, %v232
    %v580 = vmul.f32 %v578, %v232
    %v581 = vrot.slane %v579, 4
    %v582 = vadd.f32 %v579, %v581
    %v583 = vrot.slane %v582, 2
    %v584 = vadd.f32 %v582, %v583
    %v585 = vrot.slane %v584, 1
    %v586 = vadd.f32 %v584, %v585
    %v587 = vrot.slane %v580, 4
    %v588 = vadd.f32 %v580, %v587
    %v589 = vrot.slane %v588, 2
    %v590 = vadd.f32 %v588, %v589
    %v591 = vrot.slane %v590, 1
    %v592 = vadd.f32 %v590, %v591
    %v593 = vmul.f32 %v586, %v249
    %v594 = vmul.f32 %v592, %v249
    %v595 = vadd.f32 %v593, 1e-05
    %v596 = vadd.f32 %v594, 1e-05
    %v597 = vrsqrt.pop %v595
    %v598 = vrsqrt.pop %v596
    %v599 = vmul.f32 %v575, %v597
    %v600 = vmul.f32 %v576, %v598
    %v602 = vlaneseq
    %v603 = vshrl.u32 %v602, 7
    %v604 = vsub.s32 0, %v603
    %v605 = vrot.slane %v557, %v604
    %v606 = vlaneseq
    %v607 = vshrl.u32 %v606, 7
    %v608 = vsub.s32 1, %v607
    %v609 = vrot.slane %v557, %v608
    %v612 = vmul.f32 %v599, %v605
    %v613 = vmul.f32 %v600, %v609
    %v615 = vlaneseq
    %v616 = vshrl.u32 %v615, 7
    %v617 = vsub.s32 0, %v616
    %v618 = vrot.slane %v558, %v617
    %v619 = vlaneseq
    %v620 = vshrl.u32 %v619, 7
    %v621 = vsub.s32 1, %v620
    %v622 = vrot.slane %v558, %v621
    %v625 = vadd.f32 %v612, %v618
    %v626 = vadd.f32 %v613, %v622
    %vm627 = vcmp.gt.f32.partialorder %v625, 0.0
    %vm628 = vcmp.gt.f32.partialorder %v626, 0.0
    %v629 = vmul.f32 %v625, 0.01
    %v630 = vmul.f32 %v626, 0.01
    %v631 = vsel %vm627, %v625, %v629
    %v632 = vsel %vm628, %v626, %v630
    %v633 = vpack.c.bf16 %v631, %v631
    %v634 = vpack.c.bf16 %v632, %v632
    %s635 = scalar_lea.vmem [#allocation2], 256
    %v636 = vld [vmem:[%s635] sm:$0xff]
    %v637 = vld [vmem:[%s635 + $0x8] sm:$0xff]
    %v638 = vld [vmem:[%s635 + $0x10] sm:$0xff]
    %v639 = vld [vmem:[%s635 + $0x18] sm:$0xff]
    %v640 = vld [vmem:[%s635 + $0x20] sm:$0xff]
    %v641 = vld [vmem:[%s635 + $0x28] sm:$0xff]
    %v642 = vld [vmem:[%s635 + $0x30] sm:$0xff]
    %v643 = vld [vmem:[%s635 + $0x38] sm:$0xff]
    %v644 = vld [vmem:[%s635 + $0x40] sm:$0xff]
    %v645 = vld [vmem:[%s635 + $0x48] sm:$0xff]
    %v646 = vld [vmem:[%s635 + $0x50] sm:$0xff]
    %v647 = vld [vmem:[%s635 + $0x58] sm:$0xff]
    %v648 = vld [vmem:[%s635 + $0x60] sm:$0xff]
    %v649 = vld [vmem:[%s635 + $0x68] sm:$0xff]
    %v650 = vld [vmem:[%s635 + $0x70] sm:$0xff]
    %v651 = vld [vmem:[%s635 + $0x78] sm:$0xff]
    %v652 = vld [vmem:[%s635 + $0x80] sm:$0xff]
    %v653 = vld [vmem:[%s635 + $0x88] sm:$0xff]
    %v654 = vld [vmem:[%s635 + $0x90] sm:$0xff]
    %v655 = vld [vmem:[%s635 + $0x98] sm:$0xff]
    %v656 = vld [vmem:[%s635 + $0xa0] sm:$0xff]
    %v657 = vld [vmem:[%s635 + $0xa8] sm:$0xff]
    %v658 = vld [vmem:[%s635 + $0xb0] sm:$0xff]
    %v659 = vld [vmem:[%s635 + $0xb8] sm:$0xff]
    %v660 = vld [vmem:[%s635 + $0xc0] sm:$0xff]
    %v661 = vld [vmem:[%s635 + $0xc8] sm:$0xff]
    %v662 = vld [vmem:[%s635 + $0xd0] sm:$0xff]
    %v663 = vld [vmem:[%s635 + $0xd8] sm:$0xff]
    %v664 = vld [vmem:[%s635 + $0xe0] sm:$0xff]
    %v665 = vld [vmem:[%s635 + $0xe8] sm:$0xff]
    %v666 = vld [vmem:[%s635 + $0xf0] sm:$0xff]
    %v667 = vld [vmem:[%s635 + $0xf8] sm:$0xff]
    %s668 = scalar_lea.vmem %s7, 2
    %v669 = vld [vmem:[%s668] sm:$0x3]
    %v671 = vlaneseq
    %v672 = vshrl.u32 %v671, 7
    %v673 = vsub.s32 0, %v672
    %v674 = vrot.slane %v669, %v673
    %v675 = vlaneseq
    %v676 = vshrl.u32 %v675, 7
    %v677 = vsub.s32 1, %v676
    %v678 = vrot.slane %v669, %v677
    %v713 = vunpack.c.l.b16 %v636
    %v714 = vunpack.c.h.b16 %v636
    %v715 = vunpack.c.l.b16 %v637
    %v716 = vunpack.c.h.b16 %v637
    %v717 = vunpack.c.l.b16 %v638
    %v718 = vunpack.c.h.b16 %v638
    %v719 = vunpack.c.l.b16 %v639
    %v720 = vunpack.c.h.b16 %v639
    %v721 = vunpack.c.l.b16 %v640
    %v722 = vunpack.c.h.b16 %v640
    %v723 = vunpack.c.l.b16 %v641
    %v724 = vunpack.c.h.b16 %v641
    %v725 = vunpack.c.l.b16 %v642
    %v726 = vunpack.c.h.b16 %v642
    %v727 = vunpack.c.l.b16 %v643
    %v728 = vunpack.c.h.b16 %v643
    %v729 = vunpack.c.l.b16 %v644
    %v730 = vunpack.c.h.b16 %v644
    %v731 = vunpack.c.l.b16 %v645
    %v732 = vunpack.c.h.b16 %v645
    %v733 = vunpack.c.l.b16 %v646
    %v734 = vunpack.c.h.b16 %v646
    %v735 = vunpack.c.l.b16 %v647
    %v736 = vunpack.c.h.b16 %v647
    %v737 = vunpack.c.l.b16 %v648
    %v738 = vunpack.c.h.b16 %v648
    %v739 = vunpack.c.l.b16 %v649
    %v740 = vunpack.c.h.b16 %v649
    %v741 = vunpack.c.l.b16 %v650
    %v742 = vunpack.c.h.b16 %v650
    %v743 = vunpack.c.l.b16 %v651
    %v744 = vunpack.c.h.b16 %v651
    %v745 = vunpack.c.l.b16 %v652
    %v746 = vunpack.c.h.b16 %v652
    %v747 = vunpack.c.l.b16 %v653
    %v748 = vunpack.c.h.b16 %v653
    %v749 = vunpack.c.l.b16 %v654
    %v750 = vunpack.c.h.b16 %v654
    %v751 = vunpack.c.l.b16 %v655
    %v752 = vunpack.c.h.b16 %v655
    %v753 = vunpack.c.l.b16 %v656
    %v754 = vunpack.c.h.b16 %v656
    %v755 = vunpack.c.l.b16 %v657
    %v756 = vunpack.c.h.b16 %v657
    %v757 = vunpack.c.l.b16 %v658
    %v758 = vunpack.c.h.b16 %v658
    %v759 = vunpack.c.l.b16 %v659
    %v760 = vunpack.c.h.b16 %v659
    %v761 = vunpack.c.l.b16 %v660
    %v762 = vunpack.c.h.b16 %v660
    %v763 = vunpack.c.l.b16 %v661
    %v764 = vunpack.c.h.b16 %v661
    %v765 = vunpack.c.l.b16 %v662
    %v766 = vunpack.c.h.b16 %v662
    %v767 = vunpack.c.l.b16 %v663
    %v768 = vunpack.c.h.b16 %v663
    %v769 = vunpack.c.l.b16 %v664
    %v770 = vunpack.c.h.b16 %v664
    %v771 = vunpack.c.l.b16 %v665
    %v772 = vunpack.c.h.b16 %v665
    %v773 = vunpack.c.l.b16 %v666
    %v774 = vunpack.c.h.b16 %v666
    %v775 = vunpack.c.l.b16 %v667
    %v776 = vunpack.c.h.b16 %v667
    %v777 = vpack.c.b16 %v715, %v713
    %v778 = vpack.c.b16 %v716, %v714
    %v779 = vpack.c.b16 %v719, %v717
    %v780 = vpack.c.b16 %v720, %v718
    %v781 = vpack.c.b16 %v723, %v721
    %v782 = vpack.c.b16 %v724, %v722
    %v783 = vpack.c.b16 %v727, %v725
    %v784 = vpack.c.b16 %v728, %v726
    %v785 = vpack.c.b16 %v731, %v729
    %v786 = vpack.c.b16 %v732, %v730
    %v787 = vpack.c.b16 %v735, %v733
    %v788 = vpack.c.b16 %v736, %v734
    %v789 = vpack.c.b16 %v739, %v737
    %v790 = vpack.c.b16 %v740, %v738
    %v791 = vpack.c.b16 %v743, %v741
    %v792 = vpack.c.b16 %v744, %v742
    %v793 = vpack.c.b16 %v747, %v745
    %v794 = vpack.c.b16 %v748, %v746
    %v795 = vpack.c.b16 %v751, %v749
    %v796 = vpack.c.b16 %v752, %v750
    %v797 = vpack.c.b16 %v755, %v753
    %v798 = vpack.c.b16 %v756, %v754
    %v799 = vpack.c.b16 %v759, %v757
    %v800 = vpack.c.b16 %v760, %v758
    %v801 = vpack.c.b16 %v763, %v761
    %v802 = vpack.c.b16 %v764, %v762
    %v803 = vpack.c.b16 %v767, %v765
    %v804 = vpack.c.b16 %v768, %v766
    %v805 = vpack.c.b16 %v771, %v769
    %v806 = vpack.c.b16 %v772, %v770
    %v807 = vpack.c.b16 %v775, %v773
    %v808 = vpack.c.b16 %v776, %v774
    %841 = vmatprep.subr.bf16.mxu0 %v778
    %842 = vmatpush1.bf16.msra.mxu0 %v777
    %843 = vmatprep.subr.bf16.mxu0 %v780
    %844 = vmatpush1.bf16.msra.mxu0 %v779
    %845 = vmatprep.subr.bf16.mxu0 %v782
    %846 = vmatpush1.bf16.msra.mxu0 %v781
    %847 = vmatprep.subr.bf16.mxu0 %v784
    %848 = vmatpush1.bf16.msra.mxu0 %v783
    %849 = vmatprep.subr.bf16.mxu0 %v786
    %850 = vmatpush1.bf16.msra.mxu0 %v785
    %851 = vmatprep.subr.bf16.mxu0 %v788
    %852 = vmatpush1.bf16.msra.mxu0 %v787
    %853 = vmatprep.subr.bf16.mxu0 %v790
    %854 = vmatpush1.bf16.msra.mxu0 %v789
    %855 = vmatprep.subr.bf16.mxu0 %v792
    %856 = vmatpush1.bf16.msra.mxu0 %v791
    %857 = vmatprep.subr.bf16.mxu0 %v794
    %858 = vmatpush1.bf16.msra.mxu0 %v793
    %859 = vmatprep.subr.bf16.mxu0 %v796
    %860 = vmatpush1.bf16.msra.mxu0 %v795
    %861 = vmatprep.subr.bf16.mxu0 %v798
    %862 = vmatpush1.bf16.msra.mxu0 %v797
    %863 = vmatprep.subr.bf16.mxu0 %v800
    %864 = vmatpush1.bf16.msra.mxu0 %v799
    %865 = vmatprep.subr.bf16.mxu0 %v802
    %866 = vmatpush1.bf16.msra.mxu0 %v801
    %867 = vmatprep.subr.bf16.mxu0 %v804
    %868 = vmatpush1.bf16.msra.mxu0 %v803
    %869 = vmatprep.subr.bf16.mxu0 %v806
    %870 = vmatpush1.bf16.msra.mxu0 %v805
    %871 = vmatprep.subr.bf16.mxu0 %v808
    %872 = vmatpush1.bf16.msra.mxu0 %v807
    %873 = vmatprep.mubr.bf16.mxu0 %v634
    %874 = vmatmul.mubr.bf16.gmra.mrb[0].mxu0 %v633
    %v875 = vpop.f32.mrb[0].mxu0
    %v876 = vadd.f32 %v674, %v875
    %v877 = vpop.f32.mrb[0].mxu0
    %v878 = vadd.f32 %v678, %v877
    %v879 = vpop.f32.mrb[0].mxu0
    %v880 = vpop.f32.mrb[0].mxu0
    %881 = vdwg.mxu0
    %s882 = scalar_lea.vmem %s8, 2
    %v883 = vld [vmem:[%s882] sm:$0x3]
    %s884 = scalar_lea.vmem %s9, 2
    %v885 = vld [vmem:[%s884] sm:$0x3]
    %v886 = vmul.f32 %v876, %v232
    %v887 = vmul.f32 %v878, %v232
    %v888 = vrot.slane %v886, 4
    %v889 = vadd.f32 %v886, %v888
    %v890 = vrot.slane %v889, 2
    %v891 = vadd.f32 %v889, %v890
    %v892 = vrot.slane %v891, 1
    %v893 = vadd.f32 %v891, %v892
    %v894 = vrot.slane %v887, 4
    %v895 = vadd.f32 %v887, %v894
    %v896 = vrot.slane %v895, 2
    %v897 = vadd.f32 %v895, %v896
    %v898 = vrot.slane %v897, 1
    %v899 = vadd.f32 %v897, %v898
    %v900 = vmul.f32 %v893, %v249
    %v901 = vmul.f32 %v899, %v249
    %v902 = vsub.f32 %v876, %v900
    %v903 = vsub.f32 %v878, %v901
    %v904 = vmul.f32 %v902, %v902
    %v905 = vmul.f32 %v903, %v903
    %v906 = vmul.f32 %v904, %v232
    %v907 = vmul.f32 %v905, %v232
    %v908 = vrot.slane %v906, 4
    %v909 = vadd.f32 %v906, %v908
    %v910 = vrot.slane %v909, 2
    %v911 = vadd.f32 %v909, %v910
    %v912 = vrot.slane %v911, 1
    %v913 = vadd.f32 %v911, %v912
    %v914 = vrot.slane %v907, 4
    %v915 = vadd.f32 %v907, %v914
    %v916 = vrot.slane %v915, 2
    %v917 = vadd.f32 %v915, %v916
    %v918 = vrot.slane %v917, 1
    %v919 = vadd.f32 %v917, %v918
    %v920 = vmul.f32 %v913, %v249
    %v921 = vmul.f32 %v919, %v249
    %v922 = vadd.f32 %v920, 1e-05
    %v923 = vadd.f32 %v921, 1e-05
    %v924 = vrsqrt.pop %v922
    %v925 = vrsqrt.pop %v923
    %v926 = vmul.f32 %v902, %v924
    %v927 = vmul.f32 %v903, %v925
    %v929 = vlaneseq
    %v930 = vshrl.u32 %v929, 7
    %v931 = vsub.s32 0, %v930
    %v932 = vrot.slane %v883, %v931
    %v933 = vlaneseq
    %v934 = vshrl.u32 %v933, 7
    %v935 = vsub.s32 1, %v934
    %v936 = vrot.slane %v883, %v935
    %v939 = vmul.f32 %v926, %v932
    %v940 = vmul.f32 %v927, %v936
    %v942 = vlaneseq
    %v943 = vshrl.u32 %v942, 7
    %v944 = vsub.s32 0, %v943
    %v945 = vrot.slane %v885, %v944
    %v946 = vlaneseq
    %v947 = vshrl.u32 %v946, 7
    %v948 = vsub.s32 1, %v947
    %v949 = vrot.slane %v885, %v948
    %v952 = vadd.f32 %v939, %v945
    %v953 = vadd.f32 %v940, %v949
    %vm954 = vcmp.gt.f32.partialorder %v952, 0.0
    %vm955 = vcmp.gt.f32.partialorder %v953, 0.0
    %v956 = vmul.f32 %v952, 0.01
    %v957 = vmul.f32 %v953, 0.01
    %v958 = vsel %vm954, %v952, %v956
    %v959 = vsel %vm955, %v953, %v957
    %v960 = vpack.c.bf16 %v958, %v958
    %v961 = vpack.c.bf16 %v959, %v959
    %s962 = scalar_lea.vmem [#allocation2], 512
    %v963 = vld [vmem:[%s962] sm:$0xff]
    %v964 = vld [vmem:[%s962 + $0x8] sm:$0xff]
    %v965 = vld [vmem:[%s962 + $0x10] sm:$0xff]
    %v966 = vld [vmem:[%s962 + $0x18] sm:$0xff]
    %v967 = vld [vmem:[%s962 + $0x20] sm:$0xff]
    %v968 = vld [vmem:[%s962 + $0x28] sm:$0xff]
    %v969 = vld [vmem:[%s962 + $0x30] sm:$0xff]
    %v970 = vld [vmem:[%s962 + $0x38] sm:$0xff]
    %v971 = vld [vmem:[%s962 + $0x40] sm:$0xff]
    %v972 = vld [vmem:[%s962 + $0x48] sm:$0xff]
    %v973 = vld [vmem:[%s962 + $0x50] sm:$0xff]
    %v974 = vld [vmem:[%s962 + $0x58] sm:$0xff]
    %v975 = vld [vmem:[%s962 + $0x60] sm:$0xff]
    %v976 = vld [vmem:[%s962 + $0x68] sm:$0xff]
    %v977 = vld [vmem:[%s962 + $0x70] sm:$0xff]
    %v978 = vld [vmem:[%s962 + $0x78] sm:$0xff]
    %v979 = vld [vmem:[%s962 + $0x80] sm:$0xff]
    %v980 = vld [vmem:[%s962 + $0x88] sm:$0xff]
    %v981 = vld [vmem:[%s962 + $0x90] sm:$0xff]
    %v982 = vld [vmem:[%s962 + $0x98] sm:$0xff]
    %v983 = vld [vmem:[%s962 + $0xa0] sm:$0xff]
    %v984 = vld [vmem:[%s962 + $0xa8] sm:$0xff]
    %v985 = vld [vmem:[%s962 + $0xb0] sm:$0xff]
    %v986 = vld [vmem:[%s962 + $0xb8] sm:$0xff]
    %v987 = vld [vmem:[%s962 + $0xc0] sm:$0xff]
    %v988 = vld [vmem:[%s962 + $0xc8] sm:$0xff]
    %v989 = vld [vmem:[%s962 + $0xd0] sm:$0xff]
    %v990 = vld [vmem:[%s962 + $0xd8] sm:$0xff]
    %v991 = vld [vmem:[%s962 + $0xe0] sm:$0xff]
    %v992 = vld [vmem:[%s962 + $0xe8] sm:$0xff]
    %v993 = vld [vmem:[%s962 + $0xf0] sm:$0xff]
    %v994 = vld [vmem:[%s962 + $0xf8] sm:$0xff]
    %s995 = scalar_lea.vmem %s7, 4
    %v996 = vld [vmem:[%s995] sm:$0x3]
    %v998 = vlaneseq
    %v999 = vshrl.u32 %v998, 7
    %v1000 = vsub.s32 0, %v999
    %v1001 = vrot.slane %v996, %v1000
    %v1002 = vlaneseq
    %v1003 = vshrl.u32 %v1002, 7
    %v1004 = vsub.s32 1, %v1003
    %v1005 = vrot.slane %v996, %v1004
    %v1040 = vunpack.c.l.b16 %v963
    %v1041 = vunpack.c.h.b16 %v963
    %v1042 = vunpack.c.l.b16 %v964
    %v1043 = vunpack.c.h.b16 %v964
    %v1044 = vunpack.c.l.b16 %v965
    %v1045 = vunpack.c.h.b16 %v965
    %v1046 = vunpack.c.l.b16 %v966
    %v1047 = vunpack.c.h.b16 %v966
    %v1048 = vunpack.c.l.b16 %v967
    %v1049 = vunpack.c.h.b16 %v967
    %v1050 = vunpack.c.l.b16 %v968
    %v1051 = vunpack.c.h.b16 %v968
    %v1052 = vunpack.c.l.b16 %v969
    %v1053 = vunpack.c.h.b16 %v969
    %v1054 = vunpack.c.l.b16 %v970
    %v1055 = vunpack.c.h.b16 %v970
    %v1056 = vunpack.c.l.b16 %v971
    %v1057 = vunpack.c.h.b16 %v971
    %v1058 = vunpack.c.l.b16 %v972
    %v1059 = vunpack.c.h.b16 %v972
    %v1060 = vunpack.c.l.b16 %v973
    %v1061 = vunpack.c.h.b16 %v973
    %v1062 = vunpack.c.l.b16 %v974
    %v1063 = vunpack.c.h.b16 %v974
    %v1064 = vunpack.c.l.b16 %v975
    %v1065 = vunpack.c.h.b16 %v975
    %v1066 = vunpack.c.l.b16 %v976
    %v1067 = vunpack.c.h.b16 %v976
    %v1068 = vunpack.c.l.b16 %v977
    %v1069 = vunpack.c.h.b16 %v977
    %v1070 = vunpack.c.l.b16 %v978
    %v1071 = vunpack.c.h.b16 %v978
    %v1072 = vunpack.c.l.b16 %v979
    %v1073 = vunpack.c.h.b16 %v979
    %v1074 = vunpack.c.l.b16 %v980
    %v1075 = vunpack.c.h.b16 %v980
    %v1076 = vunpack.c.l.b16 %v981
    %v1077 = vunpack.c.h.b16 %v981
    %v1078 = vunpack.c.l.b16 %v982
    %v1079 = vunpack.c.h.b16 %v982
    %v1080 = vunpack.c.l.b16 %v983
    %v1081 = vunpack.c.h.b16 %v983
    %v1082 = vunpack.c.l.b16 %v984
    %v1083 = vunpack.c.h.b16 %v984
    %v1084 = vunpack.c.l.b16 %v985
    %v1085 = vunpack.c.h.b16 %v985
    %v1086 = vunpack.c.l.b16 %v986
    %v1087 = vunpack.c.h.b16 %v986
    %v1088 = vunpack.c.l.b16 %v987
    %v1089 = vunpack.c.h.b16 %v987
    %v1090 = vunpack.c.l.b16 %v988
    %v1091 = vunpack.c.h.b16 %v988
    %v1092 = vunpack.c.l.b16 %v989
    %v1093 = vunpack.c.h.b16 %v989
    %v1094 = vunpack.c.l.b16 %v990
    %v1095 = vunpack.c.h.b16 %v990
    %v1096 = vunpack.c.l.b16 %v991
    %v1097 = vunpack.c.h.b16 %v991
    %v1098 = vunpack.c.l.b16 %v992
    %v1099 = vunpack.c.h.b16 %v992
    %v1100 = vunpack.c.l.b16 %v993
    %v1101 = vunpack.c.h.b16 %v993
    %v1102 = vunpack.c.l.b16 %v994
    %v1103 = vunpack.c.h.b16 %v994
    %v1104 = vpack.c.b16 %v1042, %v1040
    %v1105 = vpack.c.b16 %v1043, %v1041
    %v1106 = vpack.c.b16 %v1046, %v1044
    %v1107 = vpack.c.b16 %v1047, %v1045
    %v1108 = vpack.c.b16 %v1050, %v1048
    %v1109 = vpack.c.b16 %v1051, %v1049
    %v1110 = vpack.c.b16 %v1054, %v1052
    %v1111 = vpack.c.b16 %v1055, %v1053
    %v1112 = vpack.c.b16 %v1058, %v1056
    %v1113 = vpack.c.b16 %v1059, %v1057
    %v1114 = vpack.c.b16 %v1062, %v1060
    %v1115 = vpack.c.b16 %v1063, %v1061
    %v1116 = vpack.c.b16 %v1066, %v1064
    %v1117 = vpack.c.b16 %v1067, %v1065
    %v1118 = vpack.c.b16 %v1070, %v1068
    %v1119 = vpack.c.b16 %v1071, %v1069
    %v1120 = vpack.c.b16 %v1074, %v1072
    %v1121 = vpack.c.b16 %v1075, %v1073
    %v1122 = vpack.c.b16 %v1078, %v1076
    %v1123 = vpack.c.b16 %v1079, %v1077
    %v1124 = vpack.c.b16 %v1082, %v1080
    %v1125 = vpack.c.b16 %v1083, %v1081
    %v1126 = vpack.c.b16 %v1086, %v1084
    %v1127 = vpack.c.b16 %v1087, %v1085
    %v1128 = vpack.c.b16 %v1090, %v1088
    %v1129 = vpack.c.b16 %v1091, %v1089
    %v1130 = vpack.c.b16 %v1094, %v1092
    %v1131 = vpack.c.b16 %v1095, %v1093
    %v1132 = vpack.c.b16 %v1098, %v1096
    %v1133 = vpack.c.b16 %v1099, %v1097
    %v1134 = vpack.c.b16 %v1102, %v1100
    %v1135 = vpack.c.b16 %v1103, %v1101
    %1168 = vmatprep.subr.bf16.mxu0 %v1105
    %1169 = vmatpush1.bf16.msra.mxu0 %v1104
    %1170 = vmatprep.subr.bf16.mxu0 %v1107
    %1171 = vmatpush1.bf16.msra.mxu0 %v1106
    %1172 = vmatprep.subr.bf16.mxu0 %v1109
    %1173 = vmatpush1.bf16.msra.mxu0 %v1108
    %1174 = vmatprep.subr.bf16.mxu0 %v1111
    %1175 = vmatpush1.bf16.msra.mxu0 %v1110
    %1176 = vmatprep.subr.bf16.mxu0 %v1113
    %1177 = vmatpush1.bf16.msra.mxu0 %v1112
    %1178 = vmatprep.subr.bf16.mxu0 %v1115
    %1179 = vmatpush1.bf16.msra.mxu0 %v1114
    %1180 = vmatprep.subr.bf16.mxu0 %v1117
    %1181 = vmatpush1.bf16.msra.mxu0 %v1116
    %1182 = vmatprep.subr.bf16.mxu0 %v1119
    %1183 = vmatpush1.bf16.msra.mxu0 %v1118
    %1184 = vmatprep.subr.bf16.mxu0 %v1121
    %1185 = vmatpush1.bf16.msra.mxu0 %v1120
    %1186 = vmatprep.subr.bf16.mxu0 %v1123
    %1187 = vmatpush1.bf16.msra.mxu0 %v1122
    %1188 = vmatprep.subr.bf16.mxu0 %v1125
    %1189 = vmatpush1.bf16.msra.mxu0 %v1124
    %1190 = vmatprep.subr.bf16.mxu0 %v1127
    %1191 = vmatpush1.bf16.msra.mxu0 %v1126
    %1192 = vmatprep.subr.bf16.mxu0 %v1129
    %1193 = vmatpush1.bf16.msra.mxu0 %v1128
    %1194 = vmatprep.subr.bf16.mxu0 %v1131
    %1195 = vmatpush1.bf16.msra.mxu0 %v1130
    %1196 = vmatprep.subr.bf16.mxu0 %v1133
    %1197 = vmatpush1.bf16.msra.mxu0 %v1132
    %1198 = vmatprep.subr.bf16.mxu0 %v1135
    %1199 = vmatpush1.bf16.msra.mxu0 %v1134
    %1200 = vmatprep.mubr.bf16.mxu0 %v961
    %1201 = vmatmul.mubr.bf16.gmra.mrb[0].mxu0 %v960
    %v1202 = vpop.f32.mrb[0].mxu0
    %v1203 = vadd.f32 %v1001, %v1202
    %v1204 = vpop.f32.mrb[0].mxu0
    %v1205 = vadd.f32 %v1005, %v1204
    %v1206 = vpop.f32.mrb[0].mxu0
    %v1207 = vpop.f32.mrb[0].mxu0
    %1208 = vdwg.mxu0
    %s1209 = scalar_lea.vmem %s8, 4
    %v1210 = vld [vmem:[%s1209] sm:$0x3]
    %s1211 = scalar_lea.vmem %s9, 4
    %v1212 = vld [vmem:[%s1211] sm:$0x3]
    %v1213 = vmul.f32 %v1203, %v232
    %v1214 = vmul.f32 %v1205, %v232
    %v1215 = vrot.slane %v1213, 4
    %v1216 = vadd.f32 %v1213, %v1215
    %v1217 = vrot.slane %v1216, 2
    %v1218 = vadd.f32 %v1216, %v1217
    %v1219 = vrot.slane %v1218, 1
    %v1220 = vadd.f32 %v1218, %v1219
    %v1221 = vrot.slane %v1214, 4
    %v1222 = vadd.f32 %v1214, %v1221
    %v1223 = vrot.slane %v1222, 2
    %v1224 = vadd.f32 %v1222, %v1223
    %v1225 = vrot.slane %v1224, 1
    %v1226 = vadd.f32 %v1224, %v1225
    %v1227 = vmul.f32 %v1220, %v249
    %v1228 = vmul.f32 %v1226, %v249
    %v1229 = vsub.f32 %v1203, %v1227
    %v1230 = vsub.f32 %v1205, %v1228
    %v1231 = vmul.f32 %v1229, %v1229
    %v1232 = vmul.f32 %v1230, %v1230
    %v1233 = vmul.f32 %v1231, %v232
    %v1234 = vmul.f32 %v1232, %v232
    %v1235 = vrot.slane %v1233, 4
    %v1236 = vadd.f32 %v1233, %v1235
    %v1237 = vrot.slane %v1236, 2
    %v1238 = vadd.f32 %v1236, %v1237
    %v1239 = vrot.slane %v1238, 1
    %v1240 = vadd.f32 %v1238, %v1239
    %v1241 = vrot.slane %v1234, 4
    %v1242 = vadd.f32 %v1234, %v1241
    %v1243 = vrot.slane %v1242, 2
    %v1244 = vadd.f32 %v1242, %v1243
    %v1245 = vrot.slane %v1244, 1
    %v1246 = vadd.f32 %v1244, %v1245
    %v1247 = vmul.f32 %v1240, %v249
    %v1248 = vmul.f32 %v1246, %v249
    %v1249 = vadd.f32 %v1247, 1e-05
    %v1250 = vadd.f32 %v1248, 1e-05
    %v1251 = vrsqrt.pop %v1249
    %v1252 = vrsqrt.pop %v1250
    %v1253 = vmul.f32 %v1229, %v1251
    %v1254 = vmul.f32 %v1230, %v1252
    %v1256 = vlaneseq
    %v1257 = vshrl.u32 %v1256, 7
    %v1258 = vsub.s32 0, %v1257
    %v1259 = vrot.slane %v1210, %v1258
    %v1260 = vlaneseq
    %v1261 = vshrl.u32 %v1260, 7
    %v1262 = vsub.s32 1, %v1261
    %v1263 = vrot.slane %v1210, %v1262
    %v1266 = vmul.f32 %v1253, %v1259
    %v1267 = vmul.f32 %v1254, %v1263
    %v1269 = vlaneseq
    %v1270 = vshrl.u32 %v1269, 7
    %v1271 = vsub.s32 0, %v1270
    %v1272 = vrot.slane %v1212, %v1271
    %v1273 = vlaneseq
    %v1274 = vshrl.u32 %v1273, 7
    %v1275 = vsub.s32 1, %v1274
    %v1276 = vrot.slane %v1212, %v1275
    %v1279 = vadd.f32 %v1266, %v1272
    %v1280 = vadd.f32 %v1267, %v1276
    %vm1281 = vcmp.gt.f32.partialorder %v1279, 0.0
    %vm1282 = vcmp.gt.f32.partialorder %v1280, 0.0
    %v1283 = vmul.f32 %v1279, 0.01
    %v1284 = vmul.f32 %v1280, 0.01
    %v1285 = vsel %vm1281, %v1279, %v1283
    %v1286 = vsel %vm1282, %v1280, %v1284
    %v1287 = vpack.c.bf16 %v1285, %v1285
    %v1288 = vpack.c.bf16 %v1286, %v1286
    %s1289 = scalar_lea.vmem [#allocation2], 768
    %v1290 = vld [vmem:[%s1289] sm:$0xff]
    %v1291 = vld [vmem:[%s1289 + $0x8] sm:$0xff]
    %v1292 = vld [vmem:[%s1289 + $0x10] sm:$0xff]
    %v1293 = vld [vmem:[%s1289 + $0x18] sm:$0xff]
    %v1294 = vld [vmem:[%s1289 + $0x20] sm:$0xff]
    %v1295 = vld [vmem:[%s1289 + $0x28] sm:$0xff]
    %v1296 = vld [vmem:[%s1289 + $0x30] sm:$0xff]
    %v1297 = vld [vmem:[%s1289 + $0x38] sm:$0xff]
    %v1298 = vld [vmem:[%s1289 + $0x40] sm:$0xff]
    %v1299 = vld [vmem:[%s1289 + $0x48] sm:$0xff]
    %v1300 = vld [vmem:[%s1289 + $0x50] sm:$0xff]
    %v1301 = vld [vmem:[%s1289 + $0x58] sm:$0xff]
    %v1302 = vld [vmem:[%s1289 + $0x60] sm:$0xff]
    %v1303 = vld [vmem:[%s1289 + $0x68] sm:$0xff]
    %v1304 = vld [vmem:[%s1289 + $0x70] sm:$0xff]
    %v1305 = vld [vmem:[%s1289 + $0x78] sm:$0xff]
    %v1306 = vld [vmem:[%s1289 + $0x80] sm:$0xff]
    %v1307 = vld [vmem:[%s1289 + $0x88] sm:$0xff]
    %v1308 = vld [vmem:[%s1289 + $0x90] sm:$0xff]
    %v1309 = vld [vmem:[%s1289 + $0x98] sm:$0xff]
    %v1310 = vld [vmem:[%s1289 + $0xa0] sm:$0xff]
    %v1311 = vld [vmem:[%s1289 + $0xa8] sm:$0xff]
    %v1312 = vld [vmem:[%s1289 + $0xb0] sm:$0xff]
    %v1313 = vld [vmem:[%s1289 + $0xb8] sm:$0xff]
    %v1314 = vld [vmem:[%s1289 + $0xc0] sm:$0xff]
    %v1315 = vld [vmem:[%s1289 + $0xc8] sm:$0xff]
    %v1316 = vld [vmem:[%s1289 + $0xd0] sm:$0xff]
    %v1317 = vld [vmem:[%s1289 + $0xd8] sm:$0xff]
    %v1318 = vld [vmem:[%s1289 + $0xe0] sm:$0xff]
    %v1319 = vld [vmem:[%s1289 + $0xe8] sm:$0xff]
    %v1320 = vld [vmem:[%s1289 + $0xf0] sm:$0xff]
    %v1321 = vld [vmem:[%s1289 + $0xf8] sm:$0xff]
    %s1322 = scalar_lea.vmem %s7, 6
    %v1323 = vld [vmem:[%s1322] sm:$0x3]
    %v1325 = vlaneseq
    %v1326 = vshrl.u32 %v1325, 7
    %v1327 = vsub.s32 0, %v1326
    %v1328 = vrot.slane %v1323, %v1327
    %v1329 = vlaneseq
    %v1330 = vshrl.u32 %v1329, 7
    %v1331 = vsub.s32 1, %v1330
    %v1332 = vrot.slane %v1323, %v1331
    %v1367 = vunpack.c.l.b16 %v1290
    %v1368 = vunpack.c.h.b16 %v1290
    %v1369 = vunpack.c.l.b16 %v1291
    %v1370 = vunpack.c.h.b16 %v1291
    %v1371 = vunpack.c.l.b16 %v1292
    %v1372 = vunpack.c.h.b16 %v1292
    %v1373 = vunpack.c.l.b16 %v1293
    %v1374 = vunpack.c.h.b16 %v1293
    %v1375 = vunpack.c.l.b16 %v1294
    %v1376 = vunpack.c.h.b16 %v1294
    %v1377 = vunpack.c.l.b16 %v1295
    %v1378 = vunpack.c.h.b16 %v1295
    %v1379 = vunpack.c.l.b16 %v1296
    %v1380 = vunpack.c.h.b16 %v1296
    %v1381 = vunpack.c.l.b16 %v1297
    %v1382 = vunpack.c.h.b16 %v1297
    %v1383 = vunpack.c.l.b16 %v1298
    %v1384 = vunpack.c.h.b16 %v1298
    %v1385 = vunpack.c.l.b16 %v1299
    %v1386 = vunpack.c.h.b16 %v1299
    %v1387 = vunpack.c.l.b16 %v1300
    %v1388 = vunpack.c.h.b16 %v1300
    %v1389 = vunpack.c.l.b16 %v1301
    %v1390 = vunpack.c.h.b16 %v1301
    %v1391 = vunpack.c.l.b16 %v1302
    %v1392 = vunpack.c.h.b16 %v1302
    %v1393 = vunpack.c.l.b16 %v1303
    %v1394 = vunpack.c.h.b16 %v1303
    %v1395 = vunpack.c.l.b16 %v1304
    %v1396 = vunpack.c.h.b16 %v1304
    %v1397 = vunpack.c.l.b16 %v1305
    %v1398 = vunpack.c.h.b16 %v1305
    %v1399 = vunpack.c.l.b16 %v1306
    %v1400 = vunpack.c.h.b16 %v1306
    %v1401 = vunpack.c.l.b16 %v1307
    %v1402 = vunpack.c.h.b16 %v1307
    %v1403 = vunpack.c.l.b16 %v1308
    %v1404 = vunpack.c.h.b16 %v1308
    %v1405 = vunpack.c.l.b16 %v1309
    %v1406 = vunpack.c.h.b16 %v1309
    %v1407 = vunpack.c.l.b16 %v1310
    %v1408 = vunpack.c.h.b16 %v1310
    %v1409 = vunpack.c.l.b16 %v1311
    %v1410 = vunpack.c.h.b16 %v1311
    %v1411 = vunpack.c.l.b16 %v1312
    %v1412 = vunpack.c.h.b16 %v1312
    %v1413 = vunpack.c.l.b16 %v1313
    %v1414 = vunpack.c.h.b16 %v1313
    %v1415 = vunpack.c.l.b16 %v1314
    %v1416 = vunpack.c.h.b16 %v1314
    %v1417 = vunpack.c.l.b16 %v1315
    %v1418 = vunpack.c.h.b16 %v1315
    %v1419 = vunpack.c.l.b16 %v1316
    %v1420 = vunpack.c.h.b16 %v1316
    %v1421 = vunpack.c.l.b16 %v1317
    %v1422 = vunpack.c.h.b16 %v1317
    %v1423 = vunpack.c.l.b16 %v1318
    %v1424 = vunpack.c.h.b16 %v1318
    %v1425 = vunpack.c.l.b16 %v1319
    %v1426 = vunpack.c.h.b16 %v1319
    %v1427 = vunpack.c.l.b16 %v1320
    %v1428 = vunpack.c.h.b16 %v1320
    %v1429 = vunpack.c.l.b16 %v1321
    %v1430 = vunpack.c.h.b16 %v1321
    %v1431 = vpack.c.b16 %v1369, %v1367
    %v1432 = vpack.c.b16 %v1370, %v1368
    %v1433 = vpack.c.b16 %v1373, %v1371
    %v1434 = vpack.c.b16 %v1374, %v1372
    %v1435 = vpack.c.b16 %v1377, %v1375
    %v1436 = vpack.c.b16 %v1378, %v1376
    %v1437 = vpack.c.b16 %v1381, %v1379
    %v1438 = vpack.c.b16 %v1382, %v1380
    %v1439 = vpack.c.b16 %v1385, %v1383
    %v1440 = vpack.c.b16 %v1386, %v1384
    %v1441 = vpack.c.b16 %v1389, %v1387
    %v1442 = vpack.c.b16 %v1390, %v1388
    %v1443 = vpack.c.b16 %v1393, %v1391
    %v1444 = vpack.c.b16 %v1394, %v1392
    %v1445 = vpack.c.b16 %v1397, %v1395
    %v1446 = vpack.c.b16 %v1398, %v1396
    %v1447 = vpack.c.b16 %v1401, %v1399
    %v1448 = vpack.c.b16 %v1402, %v1400
    %v1449 = vpack.c.b16 %v1405, %v1403
    %v1450 = vpack.c.b16 %v1406, %v1404
    %v1451 = vpack.c.b16 %v1409, %v1407
    %v1452 = vpack.c.b16 %v1410, %v1408
    %v1453 = vpack.c.b16 %v1413, %v1411
    %v1454 = vpack.c.b16 %v1414, %v1412
    %v1455 = vpack.c.b16 %v1417, %v1415
    %v1456 = vpack.c.b16 %v1418, %v1416
    %v1457 = vpack.c.b16 %v1421, %v1419
    %v1458 = vpack.c.b16 %v1422, %v1420
    %v1459 = vpack.c.b16 %v1425, %v1423
    %v1460 = vpack.c.b16 %v1426, %v1424
    %v1461 = vpack.c.b16 %v1429, %v1427
    %v1462 = vpack.c.b16 %v1430, %v1428
    %1495 = vmatprep.subr.bf16.mxu0 %v1432
    %1496 = vmatpush1.bf16.msra.mxu0 %v1431
    %1497 = vmatprep.subr.bf16.mxu0 %v1434
    %1498 = vmatpush1.bf16.msra.mxu0 %v1433
    %1499 = vmatprep.subr.bf16.mxu0 %v1436
    %1500 = vmatpush1.bf16.msra.mxu0 %v1435
    %1501 = vmatprep.subr.bf16.mxu0 %v1438
    %1502 = vmatpush1.bf16.msra.mxu0 %v1437
    %1503 = vmatprep.subr.bf16.mxu0 %v1440
    %1504 = vmatpush1.bf16.msra.mxu0 %v1439
    %1505 = vmatprep.subr.bf16.mxu0 %v1442
    %1506 = vmatpush1.bf16.msra.mxu0 %v1441
    %1507 = vmatprep.subr.bf16.mxu0 %v1444
    %1508 = vmatpush1.bf16.msra.mxu0 %v1443
    %1509 = vmatprep.subr.bf16.mxu0 %v1446
    %1510 = vmatpush1.bf16.msra.mxu0 %v1445
    %1511 = vmatprep.subr.bf16.mxu0 %v1448
    %1512 = vmatpush1.bf16.msra.mxu0 %v1447
    %1513 = vmatprep.subr.bf16.mxu0 %v1450
    %1514 = vmatpush1.bf16.msra.mxu0 %v1449
    %1515 = vmatprep.subr.bf16.mxu0 %v1452
    %1516 = vmatpush1.bf16.msra.mxu0 %v1451
    %1517 = vmatprep.subr.bf16.mxu0 %v1454
    %1518 = vmatpush1.bf16.msra.mxu0 %v1453
    %1519 = vmatprep.subr.bf16.mxu0 %v1456
    %1520 = vmatpush1.bf16.msra.mxu0 %v1455
    %1521 = vmatprep.subr.bf16.mxu0 %v1458
    %1522 = vmatpush1.bf16.msra.mxu0 %v1457
    %1523 = vmatprep.subr.bf16.mxu0 %v1460
    %1524 = vmatpush1.bf16.msra.mxu0 %v1459
    %1525 = vmatprep.subr.bf16.mxu0 %v1462
    %1526 = vmatpush1.bf16.msra.mxu0 %v1461
    %1527 = vmatprep.mubr.bf16.mxu0 %v1288
    %1528 = vmatmul.mubr.bf16.gmra.mrb[0].mxu0 %v1287
    %v1529 = vpop.f32.mrb[0].mxu0
    %v1530 = vadd.f32 %v1328, %v1529
    %v1531 = vpop.f32.mrb[0].mxu0
    %v1532 = vadd.f32 %v1332, %v1531
    %v1533 = vpop.f32.mrb[0].mxu0
    %v1534 = vpop.f32.mrb[0].mxu0
    %1535 = vdwg.mxu0
    %s1536 = scalar_lea.vmem %s8, 6
    %v1537 = vld [vmem:[%s1536] sm:$0x3]
    %s1538 = scalar_lea.vmem %s9, 6
    %v1539 = vld [vmem:[%s1538] sm:$0x3]
    %v1540 = vmul.f32 %v1530, %v232
    %v1541 = vmul.f32 %v1532, %v232
    %v1542 = vrot.slane %v1540, 4
    %v1543 = vadd.f32 %v1540, %v1542
    %v1544 = vrot.slane %v1543, 2
    %v1545 = vadd.f32 %v1543, %v1544
    %v1546 = vrot.slane %v1545, 1
    %v1547 = vadd.f32 %v1545, %v1546
    %v1548 = vrot.slane %v1541, 4
    %v1549 = vadd.f32 %v1541, %v1548
    %v1550 = vrot.slane %v1549, 2
    %v1551 = vadd.f32 %v1549, %v1550
    %v1552 = vrot.slane %v1551, 1
    %v1553 = vadd.f32 %v1551, %v1552
    %v1554 = vmul.f32 %v1547, %v249
    %v1555 = vmul.f32 %v1553, %v249
    %v1556 = vsub.f32 %v1530, %v1554
    %v1557 = vsub.f32 %v1532, %v1555
    %v1558 = vmul.f32 %v1556, %v1556
    %v1559 = vmul.f32 %v1557, %v1557
    %v1560 = vmul.f32 %v1558, %v232
    %v1561 = vmul.f32 %v1559, %v232
    %v1562 = vrot.slane %v1560, 4
    %v1563 = vadd.f32 %v1560, %v1562
    %v1564 = vrot.slane %v1563, 2
    %v1565 = vadd.f32 %v1563, %v1564
    %v1566 = vrot.slane %v1565, 1
    %v1567 = vadd.f32 %v1565, %v1566
    %v1568 = vrot.slane %v1561, 4
    %v1569 = vadd.f32 %v1561, %v1568
    %v1570 = vrot.slane %v1569, 2
    %v1571 = vadd.f32 %v1569, %v1570
    %v1572 = vrot.slane %v1571, 1
    %v1573 = vadd.f32 %v1571, %v1572
    %v1574 = vmul.f32 %v1567, %v249
    %v1575 = vmul.f32 %v1573, %v249
    %v1576 = vadd.f32 %v1574, 1e-05
    %v1577 = vadd.f32 %v1575, 1e-05
    %v1578 = vrsqrt.pop %v1576
    %v1579 = vrsqrt.pop %v1577
    %v1580 = vmul.f32 %v1556, %v1578
    %v1581 = vmul.f32 %v1557, %v1579
    %v1583 = vlaneseq
    %v1584 = vshrl.u32 %v1583, 7
    %v1585 = vsub.s32 0, %v1584
    %v1586 = vrot.slane %v1537, %v1585
    %v1587 = vlaneseq
    %v1588 = vshrl.u32 %v1587, 7
    %v1589 = vsub.s32 1, %v1588
    %v1590 = vrot.slane %v1537, %v1589
    %v1593 = vmul.f32 %v1580, %v1586
    %v1594 = vmul.f32 %v1581, %v1590
    %v1596 = vlaneseq
    %v1597 = vshrl.u32 %v1596, 7
    %v1598 = vsub.s32 0, %v1597
    %v1599 = vrot.slane %v1539, %v1598
    %v1600 = vlaneseq
    %v1601 = vshrl.u32 %v1600, 7
    %v1602 = vsub.s32 1, %v1601
    %v1603 = vrot.slane %v1539, %v1602
    %v1606 = vadd.f32 %v1593, %v1599
    %v1607 = vadd.f32 %v1594, %v1603
    %vm1608 = vcmp.gt.f32.partialorder %v1606, 0.0
    %vm1609 = vcmp.gt.f32.partialorder %v1607, 0.0
    %v1610 = vmul.f32 %v1606, 0.01
    %v1611 = vmul.f32 %v1607, 0.01
    %v1612 = vsel %vm1608, %v1606, %v1610
    %v1613 = vsel %vm1609, %v1607, %v1611
    %v1614 = vpack.c.bf16 %v1612, %v1612
    %v1615 = vpack.c.bf16 %v1613, %v1613
    %v1616 = vld [vmem:[%s10] sm:$0xf]
    %v1617 = vld [vmem:[%s10 + $0x4] sm:$0xf]
    %v1618 = vld [vmem:[%s10 + $0x8] sm:$0xf]
    %v1619 = vld [vmem:[%s10 + $0xc] sm:$0xf]
    %v1620 = vld [vmem:[%s10 + $0x10] sm:$0xf]
    %v1621 = vld [vmem:[%s10 + $0x14] sm:$0xf]
    %v1622 = vld [vmem:[%s10 + $0x18] sm:$0xf]
    %v1623 = vld [vmem:[%s10 + $0x1c] sm:$0xf]
    %v1624 = vld [vmem:[%s10 + $0x20] sm:$0xf]
    %v1625 = vld [vmem:[%s10 + $0x24] sm:$0xf]
    %v1626 = vld [vmem:[%s10 + $0x28] sm:$0xf]
    %v1627 = vld [vmem:[%s10 + $0x2c] sm:$0xf]
    %v1628 = vld [vmem:[%s10 + $0x30] sm:$0xf]
    %v1629 = vld [vmem:[%s10 + $0x34] sm:$0xf]
    %v1630 = vld [vmem:[%s10 + $0x38] sm:$0xf]
    %v1631 = vld [vmem:[%s10 + $0x3c] sm:$0xf]
    %v1632 = vld [vmem:[%s10 + $0x40] sm:$0xf]
    %v1633 = vld [vmem:[%s10 + $0x44] sm:$0xf]
    %v1634 = vld [vmem:[%s10 + $0x48] sm:$0xf]
    %v1635 = vld [vmem:[%s10 + $0x4c] sm:$0xf]
    %v1636 = vld [vmem:[%s10 + $0x50] sm:$0xf]
    %v1637 = vld [vmem:[%s10 + $0x54] sm:$0xf]
    %v1638 = vld [vmem:[%s10 + $0x58] sm:$0xf]
    %v1639 = vld [vmem:[%s10 + $0x5c] sm:$0xf]
    %v1640 = vld [vmem:[%s10 + $0x60] sm:$0xf]
    %v1641 = vld [vmem:[%s10 + $0x64] sm:$0xf]
    %v1642 = vld [vmem:[%s10 + $0x68] sm:$0xf]
    %v1643 = vld [vmem:[%s10 + $0x6c] sm:$0xf]
    %v1644 = vld [vmem:[%s10 + $0x70] sm:$0xf]
    %v1645 = vld [vmem:[%s10 + $0x74] sm:$0xf]
    %v1646 = vld [vmem:[%s10 + $0x78] sm:$0xf]
    %v1647 = vld [vmem:[%s10 + $0x7c] sm:$0xf]
    %v1648 = vld [vmem:[%s11] sm:$0x1]
    %v1650 = vlaneseq
    %v1651 = vshrl.u32 %v1650, 7
    %v1652 = vsub.s32 0, %v1651
    %v1653 = vrot.slane %v1648, %v1652
    %v1687 = vunpack.c.l.b16 %v1616
    %v1688 = vunpack.c.l.b16 %v1617
    %v1689 = vunpack.c.l.b16 %v1618
    %v1690 = vunpack.c.l.b16 %v1619
    %v1691 = vunpack.c.l.b16 %v1620
    %v1692 = vunpack.c.l.b16 %v1621
    %v1693 = vunpack.c.l.b16 %v1622
    %v1694 = vunpack.c.l.b16 %v1623
    %v1695 = vunpack.c.l.b16 %v1624
    %v1696 = vunpack.c.l.b16 %v1625
    %v1697 = vunpack.c.l.b16 %v1626
    %v1698 = vunpack.c.l.b16 %v1627
    %v1699 = vunpack.c.l.b16 %v1628
    %v1700 = vunpack.c.l.b16 %v1629
    %v1701 = vunpack.c.l.b16 %v1630
    %v1702 = vunpack.c.l.b16 %v1631
    %v1703 = vunpack.c.l.b16 %v1632
    %v1704 = vunpack.c.l.b16 %v1633
    %v1705 = vunpack.c.l.b16 %v1634
    %v1706 = vunpack.c.l.b16 %v1635
    %v1707 = vunpack.c.l.b16 %v1636
    %v1708 = vunpack.c.l.b16 %v1637
    %v1709 = vunpack.c.l.b16 %v1638
    %v1710 = vunpack.c.l.b16 %v1639
    %v1711 = vunpack.c.l.b16 %v1640
    %v1712 = vunpack.c.l.b16 %v1641
    %v1713 = vunpack.c.l.b16 %v1642
    %v1714 = vunpack.c.l.b16 %v1643
    %v1715 = vunpack.c.l.b16 %v1644
    %v1716 = vunpack.c.l.b16 %v1645
    %v1717 = vunpack.c.l.b16 %v1646
    %v1718 = vunpack.c.l.b16 %v1647
    %v1719 = vpack.c.b16 %v1688, %v1687
    %v1720 = vpack.c.b16 %v1690, %v1689
    %v1721 = vpack.c.b16 %v1692, %v1691
    %v1722 = vpack.c.b16 %v1694, %v1693
    %v1723 = vpack.c.b16 %v1696, %v1695
    %v1724 = vpack.c.b16 %v1698, %v1697
    %v1725 = vpack.c.b16 %v1700, %v1699
    %v1726 = vpack.c.b16 %v1702, %v1701
    %v1727 = vpack.c.b16 %v1704, %v1703
    %v1728 = vpack.c.b16 %v1706, %v1705
    %v1729 = vpack.c.b16 %v1708, %v1707
    %v1730 = vpack.c.b16 %v1710, %v1709
    %v1731 = vpack.c.b16 %v1712, %v1711
    %v1732 = vpack.c.b16 %v1714, %v1713
    %v1733 = vpack.c.b16 %v1716, %v1715
    %v1734 = vpack.c.b16 %v1718, %v1717
    %1751 = vmatprep.subr.bf16.mxu0 0
    %1752 = vmatpush1.bf16.msra.mxu0 %v1719
    %1753 = vmatprep.subr.bf16.mxu0 0
    %1754 = vmatpush1.bf16.msra.mxu0 %v1720
    %1755 = vmatprep.subr.bf16.mxu0 0
    %1756 = vmatpush1.bf16.msra.mxu0 %v1721
    %1757 = vmatprep.subr.bf16.mxu0 0
    %1758 = vmatpush1.bf16.msra.mxu0 %v1722
    %1759 = vmatprep.subr.bf16.mxu0 0
    %1760 = vmatpush1.bf16.msra.mxu0 %v1723
    %1761 = vmatprep.subr.bf16.mxu0 0
    %1762 = vmatpush1.bf16.msra.mxu0 %v1724
    %1763 = vmatprep.subr.bf16.mxu0 0
    %1764 = vmatpush1.bf16.msra.mxu0 %v1725
    %1765 = vmatprep.subr.bf16.mxu0 0
    %1766 = vmatpush1.bf16.msra.mxu0 %v1726
    %1767 = vmatprep.subr.bf16.mxu0 0
    %1768 = vmatpush1.bf16.msra.mxu0 %v1727
    %1769 = vmatprep.subr.bf16.mxu0 0
    %1770 = vmatpush1.bf16.msra.mxu0 %v1728
    %1771 = vmatprep.subr.bf16.mxu0 0
    %1772 = vmatpush1.bf16.msra.mxu0 %v1729
    %1773 = vmatprep.subr.bf16.mxu0 0
    %1774 = vmatpush1.bf16.msra.mxu0 %v1730
    %1775 = vmatprep.subr.bf16.mxu0 0
    %1776 = vmatpush1.bf16.msra.mxu0 %v1731
    %1777 = vmatprep.subr.bf16.mxu0 0
    %1778 = vmatpush1.bf16.msra.mxu0 %v1732
    %1779 = vmatprep.subr.bf16.mxu0 0
    %1780 = vmatpush1.bf16.msra.mxu0 %v1733
    %1781 = vmatprep.subr.bf16.mxu0 0
    %1782 = vmatpush1.bf16.msra.mxu0 %v1734
    %1783 = vmatprep.mubr.bf16.mxu0 %v1615
    %1784 = vmatmul.mubr.bf16.gmra.mrb[0].mxu0 %v1614
    %v1785 = vpop.f32.mrb[0].mxu0
    %v1786 = vadd.f32 %v1653, %v1785
    %v1787 = vpop.f32.mrb[0].mxu0
    %v1788 = vpop.f32.mrb[0].mxu0
    %v1789 = vpop.f32.mrb[0].mxu0
    %1790 = vdwg.mxu0
    %v1791 = vld [vmem:[%s12] sm:$0x1]
    %v1793 = vlaneseq
    %v1794 = vshrl.u32 %v1793, 7
    %v1795 = vsub.s32 0, %v1794
    %v1796 = vrot.slane %v1791, %v1795
    %v1798 = vmul.f32 %v1786, %v1796
    %v1799 = vtanh.pop %v1798
    %v1800 = vmul.f32 %v1799, 0.2
    %1801 = vst [vmem:[%s14] sm:$0xff] %v1800
    %v1802 = vld [vmem:[%s13] sm:$0xff]
    %v1803 = vld [vmem:[%s13 + $0x8] sm:$0xff]
    %v1804 = vld [vmem:[%s13 + $0x10] sm:$0xff]
    %v1805 = vld [vmem:[%s13 + $0x18] sm:$0xff]
    %v1806 = vld [vmem:[%s13 + $0x20] sm:$0xff]
    %v1807 = vld [vmem:[%s13 + $0x28] sm:$0xff]
    %v1808 = vld [vmem:[%s13 + $0x30] sm:$0xff]
    %v1809 = vld [vmem:[%s13 + $0x38] sm:$0xff]
    %v1810 = vld [vmem:[%s13 + $0x40] sm:$0xff]
    %v1811 = vld [vmem:[%s13 + $0x48] sm:$0xff]
    %v1812 = vld [vmem:[%s13 + $0x50] sm:$0xff]
    %v1813 = vld [vmem:[%s13 + $0x58] sm:$0xff]
    %v1814 = vld [vmem:[%s13 + $0x60] sm:$0xff]
    %v1815 = vld [vmem:[%s13 + $0x68] sm:$0xff]
    %v1816 = vld [vmem:[%s13 + $0x70] sm:$0xff]
    %v1817 = vld [vmem:[%s13 + $0x78] sm:$0xff]
    %1818 = vmatprep.subr.mxu0 0.0
    %1819 = vmatpush1.msra.mxu0 %v1802
    %1820 = vmatprep.subr.mxu0 0.0
    %1821 = vmatpush1.msra.mxu0 %v1803
    %1822 = vmatprep.subr.mxu0 0.0
    %1823 = vmatpush1.msra.mxu0 %v1804
    %1824 = vmatprep.subr.mxu0 0.0
    %1825 = vmatpush1.msra.mxu0 %v1805
    %1826 = vmatprep.subr.mxu0 0.0
    %1827 = vmatpush1.msra.mxu0 %v1806
    %1828 = vmatprep.subr.mxu0 0.0
    %1829 = vmatpush1.msra.mxu0 %v1807
    %1830 = vmatprep.subr.mxu0 0.0
    %1831 = vmatpush1.msra.mxu0 %v1808
    %1832 = vmatprep.subr.mxu0 0.0
    %1833 = vmatpush1.msra.mxu0 %v1809
    %1834 = vmatprep.subr.mxu0 0.0
    %1835 = vmatpush1.msra.mxu0 %v1810
    %1836 = vmatprep.subr.mxu0 0.0
    %1837 = vmatpush1.msra.mxu0 %v1811
    %1838 = vmatprep.subr.mxu0 0.0
    %1839 = vmatpush1.msra.mxu0 %v1812
    %1840 = vmatprep.subr.mxu0 0.0
    %1841 = vmatpush1.msra.mxu0 %v1813
    %1842 = vmatprep.subr.mxu0 0.0
    %1843 = vmatpush1.msra.mxu0 %v1814
    %1844 = vmatprep.subr.mxu0 0.0
    %1845 = vmatpush1.msra.mxu0 %v1815
    %1846 = vmatprep.subr.mxu0 0.0
    %1847 = vmatpush1.msra.mxu0 %v1816
    %1848 = vmatprep.subr.mxu0 0.0
    %1849 = vmatpush1.msra.mxu0 %v1817
    %1850 = vmatprep.subr.mxu0 0.0
    %1851 = vmatpush1.msra.mxu0 0.0
    %1852 = vmatprep.subr.mxu0 0.0
    %1853 = vmatpush1.msra.mxu0 0.0
    %1854 = vmatprep.subr.mxu0 0.0
    %1855 = vmatpush1.msra.mxu0 0.0
    %1856 = vmatprep.subr.mxu0 0.0
    %1857 = vmatpush1.msra.mxu0 0.0
    %1858 = vmatprep.subr.mxu0 0.0
    %1859 = vmatpush1.msra.mxu0 0.0
    %1860 = vmatprep.subr.mxu0 0.0
    %1861 = vmatpush1.msra.mxu0 0.0
    %1862 = vmatprep.subr.mxu0 0.0
    %1863 = vmatpush1.msra.mxu0 0.0
    %1864 = vmatprep.subr.mxu0 0.0
    %1865 = vmatpush1.msra.mxu0 0.0
    %1866 = vmatprep.subr.mxu0 0.0
    %1867 = vmatpush1.msra.mxu0 0.0
    %1868 = vmatprep.subr.mxu0 0.0
    %1869 = vmatpush1.msra.mxu0 0.0
    %1870 = vmatprep.subr.mxu0 0.0
    %1871 = vmatpush1.msra.mxu0 0.0
    %1872 = vmatprep.subr.mxu0 0.0
    %1873 = vmatpush1.msra.mxu0 0.0
    %1874 = vmatprep.subr.mxu0 0.0
    %1875 = vmatpush1.msra.mxu0 0.0
    %1876 = vmatprep.subr.mxu0 0.0
    %1877 = vmatpush1.msra.mxu0 0.0
    %1878 = vmatprep.subr.mxu0 0.0
    %1879 = vmatpush1.msra.mxu0 0.0
    %1880 = vmatprep.subr.mxu0 0.0
    %1881 = vmatpush1.msra.mxu0 0.0
    %1882 = vmatprep.mubr.f32.mxu0 0.0
    %1883 = vmatmul.mubr.f32.gmra.mrb[0].mxu0 %v1800
    %v1884 = vpop.f32.mrb[0].mxu0
    %v1885 = vadd.f32 1.0, %v1884
    %v1886 = vpop.f32.mrb[0].mxu0
    %1887 = vdwg.mxu0
    %vm1888 = vcmask 392192
    %1889 = vst.msk [vmem:[%s15] sm:$0xff] %vm1888, %v1885
    // Predicated region
    $region62: #{bl_generator_forward.2} parent=1 // pred_check
      _
    $region63: #{bl_generator_forward.2} parent=1 // pred_check_branch
      %1891 = sbr.rel (0) target = $region65
    $region64: #{bl_generator_forward.2} parent=1 // pred_region
      _
    $region65: #{bl_generator_forward.2} parent=1 // pred_fallthru
      _
    // Predicated region
    $region66: #{bl_generator_forward.2} parent=1 // pred_check
      _
    $region67: #{bl_generator_forward.2} parent=1 // pred_check_branch
      %1893 = sbr.rel (0) target = $region69
    $region68: #{bl_generator_forward.2} parent=1 // pred_region
      _
    $region69: #{bl_generator_forward.2} parent=1 // pred_fallthru
      _
    // Predicated region
    $region70: #{bl_generator_forward.2} parent=1 // pred_check
      _
    $region71: #{bl_generator_forward.2} parent=1 // pred_check_branch
      %1895 = sbr.rel (0) target = $region73
    $region72: #{bl_generator_forward.2} parent=1 // pred_region
      _
    $region73: #{bl_generator_forward.2} parent=1 // pred_fallthru
      _
    // Predicated region
    $region74: #{bl_generator_forward.2} parent=1 // pred_check
      _
    $region75: #{bl_generator_forward.2} parent=1 // pred_check_branch
      %1897 = sbr.rel (0) target = $region77
    $region76: #{bl_generator_forward.2} parent=1 // pred_region
      _
    $region77: #{bl_generator_forward.2} parent=1 // pred_fallthru
      _
    %1898 = vsyncpa [#allocation3], 1

</llo_original>
